<compile_context>
chip_gen: v7x
topology: tpu7x:2x2x1
jax: 0.10.0
libtpu: 0.0.40
codegen_flags: <defaults>
</compile_context>

<pallas_src>
from functools import partial

import numpy as np

import jax
import jax.numpy as jnp
from jax.experimental import pallas as pl
from jax.experimental.pallas import tpu as pltpu


def _adaptive_pool_matrix(in_size: int, out_size: int) -> np.ndarray:
    """P of shape (out_size, in_size): (P @ x) = adaptive average pool along one axis.

    Windows follow torch.nn.AdaptiveAvgPool2d: [floor(i*I/O), ceil((i+1)*I/O)),
    each normalized by its own window length.
    """
    m = np.zeros((out_size, in_size), dtype=np.float64)
    for i in range(out_size):
        s = (i * in_size) // out_size
        e = ((i + 1) * in_size + out_size - 1) // out_size
        m[i, s:e] = 1.0 / (e - s)
    return m


def _round_up(x: int, m: int) -> int:
    return ((x + m - 1) // m) * m


def _cdiv(a: int, b: int) -> int:
    return (a + b - 1) // b


def _choose_channel_block(nc, h, w, ho, wo, in_itemsize, p_itemsize,
                          budget_bytes=10 * 1024 * 1024, max_block=1024):
    """Channel-chunk size B (leading block dim) and grid size.

    The per-channel estimate uses (8,128)-tile-padded spatial dims (real VMEM
    footprint), double-buffered I/O blocks, the f32 kernel temporaries and the
    broadcast pooling matrices, so the working set stays well under every
    generation's scoped-VMEM limit (v5e 16 MiB default is raised explicitly).
    """
    hp, wp = _round_up(h, 8), _round_up(w, 128)
    hop, wop = _round_up(ho, 8), _round_up(wo, 128)
    hw, howo, hwo = hp * wp, hop * wop, hp * wop
    io = 2 * in_itemsize * (2 * hw + howo)            # a, out, r blocks (double-buffered)
    tmp = 4 * (2 * hw + 2 * hwo + 3 * howo)           # f32 temporaries: c, t1, t2, z/s, r32
    pbc = p_itemsize * (hop * _round_up(h, 128)       # broadcast P_H
                        + hp * _round_up(ho, 128)     # broadcast P_H^T
                        + wop * wp                    # broadcast P_W
                        + _round_up(w, 8) * _round_up(wo, 128))  # broadcast P_W^T
    per_ch = io + tmp + pbc
    b_max = max(8, min(max_block, budget_bytes // per_ch))
    steps = _cdiv(nc, b_max)
    if nc >= 256:
        steps = max(steps, 2)                         # keep both v7x TensorCores busy
    b = _cdiv(nc, steps)
    if b < nc:
        b = _round_up(b, 8)                           # sublane-friendly channel chunk
    b = min(b, nc, max_block)
    return b, _cdiv(nc, b)


def lrp_avgpool_kernel(ph_ref, pht_ref, pw_ref, pwt_ref, a_ref, r_ref, out_ref, *, eps):
    # Natural layout blocks:
    #   a_ref:   (B, H, W)      activations for B (n, c) slices (native dtype)
    #   r_ref:   (B, Ho, Wo)    incoming relevance
    #   ph_ref:  (Ho, H)        per-axis pooling matrices (tiny, VMEM-resident)
    #   pht_ref: (H, Ho)
    #   pw_ref:  (Wo, W)
    #   pwt_ref: (W, Wo)
    a = a_ref[...]
    r = r_ref[...]
    bsz = a.shape[0]

    ph = ph_ref[...]
    pht = pht_ref[...]
    pw = pw_ref[...]
    pwt = pwt_ref[...]
    pdt = ph.dtype

    # Broadcast the tiny pooling matrices across the channel batch so every matmul is
    # a plain batched MXU contraction ('bqd,bkd->bqk' / 'bqk,bkd->bqd' forms).
    ph_b = jnp.broadcast_to(ph[None], (bsz,) + ph.shape)    # (B, Ho, H)
    pht_b = jnp.broadcast_to(pht[None], (bsz,) + pht.shape)  # (B, H, Ho)
    pw_b = jnp.broadcast_to(pw[None], (bsz,) + pw.shape)    # (B, Wo, W)
    pwt_b = jnp.broadcast_to(pwt[None], (bsz,) + pwt.shape)  # (B, W, Wo)

    # Forward adaptive average pool (separable): z[b,i,j] = sum_{h,w} ph[i,h] pw[j,w] a[b,h,w]
    t1 = jnp.einsum('bhw,bjw->bhj', a, pw_b,
                    preferred_element_type=jnp.float32)               # (B, H, Wo)
    z = jnp.einsum('bih,bhj->bij', ph_b, t1.astype(pdt),
                   preferred_element_type=jnp.float32)                # (B, Ho, Wo)

    # s = r / (pool(a) + eps), computed in f32.
    s = r.astype(jnp.float32) / (z + eps)

    # Backward of the (linear) pool: c[b,h,w] = sum_{i,j} ph[i,h] pw[j,w] s[b,i,j]
    t2 = jnp.einsum('bhi,bij->bhj', pht_b, s.astype(pdt),
                    preferred_element_type=jnp.float32)               # (B, H, Wo)
    c = jnp.einsum('bhj,bwj->bhw', t2.astype(pdt), pwt_b,
                   preferred_element_type=jnp.float32)                # (B, H, W)

    out_ref[...] = (a * c).astype(out_ref.dtype)


def lrp_adaptive_avgpool2d(a, r, *, eps=1e-5):
    """a: (N, C, H, W), r: (N, C, Ho, Wo) -> relevance (N, C, H, W) in a.dtype."""
    N, C, H, W = a.shape
    Nr, Cr, Ho, Wo = r.shape
    assert (Nr, Cr) == (N, C), (r.shape, a.shape)

    NC = N * C
    # Metadata-only reshapes: no HBM traffic, no transposes, no padding.
    a3 = a.reshape(NC, H, W)
    r3 = r.reshape(NC, Ho, Wo)

    # Per-axis adaptive-pooling matrices (true AdaptiveAvgPool2d windows). For bf16
    # activations feed the MXU in bf16 (f32 accumulation keeps accuracy).
    p_dtype = jnp.bfloat16 if a.dtype == jnp.bfloat16 else jnp.float32
    p_itemsize = 2 if p_dtype == jnp.bfloat16 else 4
    ph_np = _adaptive_pool_matrix(H, Ho)
    pw_np = _adaptive_pool_matrix(W, Wo)
    ph = jnp.asarray(ph_np, dtype=p_dtype)        # (Ho, H)
    pht = jnp.asarray(ph_np.T, dtype=p_dtype)     # (H, Ho)
    pw = jnp.asarray(pw_np, dtype=p_dtype)        # (Wo, W)
    pwt = jnp.asarray(pw_np.T, dtype=p_dtype)     # (W, Wo)

    B, grid = _choose_channel_block(NC, H, W, Ho, Wo,
                                    in_itemsize=a.dtype.itemsize,
                                    p_itemsize=p_itemsize)

    flops = 4 * NC * (H * W * Wo + Ho * H * Wo) + 6 * NC * H * W
    bytes_accessed = (a.dtype.itemsize * NC * 2 * H * W
                      + r.dtype.itemsize * NC * Ho * Wo
                      + p_itemsize * 2 * (Ho * H + Wo * W))

    out3 = pl.pallas_call(
        partial(lrp_avgpool_kernel, eps=float(eps)),
        out_shape=jax.ShapeDtypeStruct((NC, H, W), a.dtype),
        grid_spec=pltpu.PrefetchScalarGridSpec(
            num_scalar_prefetch=0,
            grid=(grid,),
            in_specs=[
                pl.BlockSpec((Ho, H), lambda i: (0, 0)),      # P_H    (constant)
                pl.BlockSpec((H, Ho), lambda i: (0, 0)),      # P_H^T  (constant)
                pl.BlockSpec((Wo, W), lambda i: (0, 0)),      # P_W    (constant)
                pl.BlockSpec((W, Wo), lambda i: (0, 0)),      # P_W^T  (constant)
                pl.BlockSpec((B, H, W), lambda i: (i, 0, 0)),     # a chunk
                pl.BlockSpec((B, Ho, Wo), lambda i: (i, 0, 0)),   # r chunk
            ],
            out_specs=pl.BlockSpec((B, H, W), lambda i: (i, 0, 0)),
        ),
        compiler_params=pltpu.CompilerParams(
            dimension_semantics=("parallel",),
            vmem_limit_bytes=32 * 1024 * 1024,
        ),
        cost_estimate=pl.CostEstimate(flops=flops, transcendentals=0,
                                      bytes_accessed=bytes_accessed),
    )(ph, pht, pw, pwt, a3, r3)

    return out3.reshape(N, C, H, W)


def _reference_divisible(a, r, k, eps):
    """Plain-JAX reference for the divisible case (stride == kernel == k)."""
    N, C, H, W = a.shape
    a4 = a.reshape(N, C, H // k, k, W // k, k)
    z = a4.mean(axis=(3, 5)) + eps
    s = r / z
    c = jnp.repeat(jnp.repeat(s, k, axis=2), k, axis=3) / (k * k)
    return a * c


def _reference_adaptive(a, r, eps):
    """Numpy float64 reference with true AdaptiveAvgPool2d windows (any output size)."""
    a_np = np.asarray(a, dtype=np.float64)
    r_np = np.asarray(r, dtype=np.float64)
    N, C, H, W = a_np.shape
    Ho, Wo = r_np.shape[2], r_np.shape[3]
    z = np.zeros((N, C, Ho, Wo))
    for i in range(Ho):
        hs, he = (i * H) // Ho, ((i + 1) * H + Ho - 1) // Ho
        for j in range(Wo):
            ws, we = (j * W) // Wo, ((j + 1) * W + Wo - 1) // Wo
            z[:, :, i, j] = a_np[:, :, hs:he, ws:we].mean(axis=(2, 3))
    z += eps
    s = r_np / z
    c = np.zeros((N, C, H, W))
    for i in range(Ho):
        hs, he = (i * H) // Ho, ((i + 1) * H + Ho - 1) // Ho
        for j in range(Wo):
            ws, we = (j * W) // Wo, ((j + 1) * W + Wo - 1) // Wo
            c[:, :, hs:he, ws:we] += (s[:, :, i, j] / ((he - hs) * (we - ws)))[:, :, None, None]
    return a_np * c


if __name__ == "__main__":
    key = jax.random.PRNGKey(0)
    ka, kr, ka2, kr2 = jax.random.split(key, 4)

    # ---- divisible case: 16x16 -> 8x8 (matches fixed 2x2 avg pool) ----
    N, C, H, W = 2, 4, 16, 16
    Ho, Wo = 8, 8
    a = jax.random.uniform(ka, (N, C, H, W), dtype=jnp.float32, minval=0.0, maxval=1.0)
    r = jax.random.uniform(kr, (N, C, Ho, Wo), dtype=jnp.float32, minval=0.0, maxval=1.0)

    out = lrp_adaptive_avgpool2d(a, r, eps=1e-5)
    out = jax.block_until_ready(out)

    ref = _reference_divisible(a, r, 2, 1e-5)
    assert out.shape == (N, C, H, W)
    assert jnp.allclose(out, ref, atol=1e-4, rtol=1e-4), "mismatch vs divisible reference"

    # ---- non-divisible adaptive case: 15x15 -> 6x6 ----
    N2, C2, H2, W2 = 2, 3, 15, 15
    Ho2, Wo2 = 6, 6
    a2 = jax.random.uniform(ka2, (N2, C2, H2, W2), dtype=jnp.float32, minval=0.0, maxval=1.0)
    r2 = jax.random.uniform(kr2, (N2, C2, Ho2, Wo2), dtype=jnp.float32, minval=0.0, maxval=1.0)

    out2 = lrp_adaptive_avgpool2d(a2, r2, eps=1e-5)
    out2 = jax.block_until_ready(out2)

    ref2 = _reference_adaptive(a2, r2, 1e-5)
    assert out2.shape == (N2, C2, H2, W2)
    assert jnp.allclose(out2, jnp.asarray(ref2, dtype=jnp.float32), atol=1e-4, rtol=1e-4), (
        "mismatch vs adaptive reference"
    )

    print("KERNEL_OK")
</pallas_src>

<mosaic_0001>
module attributes {stable_mosaic.version = 11 : i64} {
  func.func @lrp_avgpool_kernel(%arg0: i32, %arg1: memref<8x16xf32, #tpu.memory_space<vmem>>, %arg2: memref<16x8xf32, #tpu.memory_space<vmem>>, %arg3: memref<8x16xf32, #tpu.memory_space<vmem>>, %arg4: memref<16x8xf32, #tpu.memory_space<vmem>>, %arg5: memref<8x16x16xf32, #tpu.memory_space<vmem>>, %arg6: memref<8x8x8xf32, #tpu.memory_space<vmem>>, %arg7: memref<8x16x16xf32, #tpu.memory_space<vmem>>) attributes {dimension_semantics = [#tpu.dimension_semantics<parallel>], iteration_bounds = array<i64: 1>, scalar_prefetch = 0 : i64, scratch_operands = 0 : i64, tpu.core_type = #tpu.core_type<tc>, window_params = [{pipeline_mode = #tpu.pipeline_mode<synchronous>, transform_indices = @transform_0, window_bounds = array<i64: 8, 16>}, {pipeline_mode = #tpu.pipeline_mode<synchronous>, transform_indices = @transform_1, window_bounds = array<i64: 16, 8>}, {pipeline_mode = #tpu.pipeline_mode<synchronous>, transform_indices = @transform_2, window_bounds = array<i64: 8, 16>}, {pipeline_mode = #tpu.pipeline_mode<synchronous>, transform_indices = @transform_3, window_bounds = array<i64: 16, 8>}, {transform_indices = @transform_4, window_bounds = array<i64: 8, 16, 16>}, {transform_indices = @transform_5, window_bounds = array<i64: 8, 8, 8>}, {transform_indices = @transform_6, window_bounds = array<i64: 8, 16, 16>}]} {
    %c0 = arith.constant 0 : index
    %c0_0 = arith.constant 0 : index
    %c0_1 = arith.constant 0 : index
    %0 = vector.load %arg5[%c0, %c0_0, %c0_1] : memref<8x16x16xf32, #tpu.memory_space<vmem>>, vector<8x16x16xf32>
    %c0_2 = arith.constant 0 : index
    %c0_3 = arith.constant 0 : index
    %c0_4 = arith.constant 0 : index
    %1 = vector.load %arg6[%c0_2, %c0_3, %c0_4] : memref<8x8x8xf32, #tpu.memory_space<vmem>>, vector<8x8x8xf32>
    %c0_5 = arith.constant 0 : index
    %c0_6 = arith.constant 0 : index
    %2 = vector.load %arg1[%c0_5, %c0_6] : memref<8x16xf32, #tpu.memory_space<vmem>>, vector<8x16xf32>
    %c0_7 = arith.constant 0 : index
    %c0_8 = arith.constant 0 : index
    %3 = vector.load %arg2[%c0_7, %c0_8] : memref<16x8xf32, #tpu.memory_space<vmem>>, vector<16x8xf32>
    %c0_9 = arith.constant 0 : index
    %c0_10 = arith.constant 0 : index
    %4 = vector.load %arg3[%c0_9, %c0_10] : memref<8x16xf32, #tpu.memory_space<vmem>>, vector<8x16xf32>
    %c0_11 = arith.constant 0 : index
    %c0_12 = arith.constant 0 : index
    %5 = vector.load %arg4[%c0_11, %c0_12] : memref<16x8xf32, #tpu.memory_space<vmem>>, vector<16x8xf32>
    %6 = vector.shape_cast %2 : vector<8x16xf32> to vector<1x8x16xf32>
    %7 = vector.shape_cast %6 : vector<1x8x16xf32> to vector<1x8x16xf32>
    %8 = vector.broadcast %7 : vector<1x8x16xf32> to vector<8x8x16xf32>
    %9 = vector.shape_cast %3 : vector<16x8xf32> to vector<1x16x8xf32>
    %10 = vector.shape_cast %9 : vector<1x16x8xf32> to vector<1x16x8xf32>
    %11 = vector.broadcast %10 : vector<1x16x8xf32> to vector<8x16x8xf32>
    %12 = vector.shape_cast %4 : vector<8x16xf32> to vector<1x8x16xf32>
    %13 = vector.shape_cast %12 : vector<1x8x16xf32> to vector<1x8x16xf32>
    %14 = vector.broadcast %13 : vector<1x8x16xf32> to vector<8x8x16xf32>
    %15 = vector.shape_cast %5 : vector<16x8xf32> to vector<1x16x8xf32>
    %16 = vector.shape_cast %15 : vector<1x16x8xf32> to vector<1x16x8xf32>
    %17 = vector.broadcast %16 : vector<1x16x8xf32> to vector<8x16x8xf32>
    "tpu.trace_start"() <{level = 10 : i32, message = "bhw,bjw->bhj"}> : () -> ()
    %cst = arith.constant dense<0.000000e+00> : vector<8x16x8xf32>
    %18 = tpu.matmul %0, %14, %cst {dimension_numbers = #tpu.dot_dimension_numbers<[2], [2], [1], [1], [0, 0, 0, 1, 1, 1], [0], [0]>} : vector<8x16x16xf32>, vector<8x8x16xf32>, vector<8x16x8xf32> -> vector<8x16x8xf32>
    "tpu.trace_stop"() : () -> ()
    "tpu.trace_start"() <{level = 10 : i32, message = "bih,bhj->bij"}> : () -> ()
    %cst_13 = arith.constant dense<0.000000e+00> : vector<8x8x8xf32>
    %19 = tpu.matmul %8, %18, %cst_13 {dimension_numbers = #tpu.dot_dimension_numbers<[2], [1], [1], [2], [0, 0, 0, 1, 1, 2], [0], [0]>} : vector<8x8x16xf32>, vector<8x16x8xf32>, vector<8x8x8xf32> -> vector<8x8x8xf32>
    "tpu.trace_stop"() : () -> ()
    %cst_14 = arith.constant 9.99999974E-6 : f32
    %20 = vector.broadcast %cst_14 : f32 to vector<8x8x8xf32>
    %21 = arith.addf %19, %20 : vector<8x8x8xf32>
    %22 = arith.divf %1, %21 : vector<8x8x8xf32>
    "tpu.trace_start"() <{level = 10 : i32, message = "bhi,bij->bhj"}> : () -> ()
    %cst_15 = arith.constant dense<0.000000e+00> : vector<8x16x8xf32>
    %23 = tpu.matmul %11, %22, %cst_15 {dimension_numbers = #tpu.dot_dimension_numbers<[2], [1], [1], [2], [0, 0, 0, 1, 1, 2], [0], [0]>} : vector<8x16x8xf32>, vector<8x8x8xf32>, vector<8x16x8xf32> -> vector<8x16x8xf32>
    "tpu.trace_stop"() : () -> ()
    "tpu.trace_start"() <{level = 10 : i32, message = "bhj,bwj->bhw"}> : () -> ()
    %cst_16 = arith.constant dense<0.000000e+00> : vector<8x16x16xf32>
    %24 = tpu.matmul %23, %17, %cst_16 {dimension_numbers = #tpu.dot_dimension_numbers<[2], [2], [1], [1], [0, 0, 0, 1, 1, 1], [0], [0]>} : vector<8x16x8xf32>, vector<8x16x8xf32>, vector<8x16x16xf32> -> vector<8x16x16xf32>
    "tpu.trace_stop"() : () -> ()
    %25 = arith.mulf %0, %24 : vector<8x16x16xf32>
    %c0_17 = arith.constant 0 : index
    %c0_18 = arith.constant 0 : index
    %c0_19 = arith.constant 0 : index
    %26 = vector.load %arg7[%c0_17, %c0_18, %c0_19] : memref<8x16x16xf32, #tpu.memory_space<vmem>>, vector<8x16x16xf32>
    tpu.vector_store %arg7[%c0_17, %c0_18, %c0_19], %25 {strides = array<i32>} : memref<8x16x16xf32, #tpu.memory_space<vmem>>, vector<8x16x16xf32>,
    return
  }
  func.func @transform_0(%arg0: i32) -> (i32, i32) {
    %c0_i32 = arith.constant 0 : i32
    %c0_i32_0 = arith.constant 0 : i32
    %c0_i32_1 = arith.constant 0 : i32
    return %c0_i32, %c0_i32_0 : i32, i32
  }
  func.func @transform_1(%arg0: i32) -> (i32, i32) {
    %c0_i32 = arith.constant 0 : i32
    %c0_i32_0 = arith.constant 0 : i32
    %c0_i32_1 = arith.constant 0 : i32
    return %c0_i32, %c0_i32_0 : i32, i32
  }
  func.func @transform_2(%arg0: i32) -> (i32, i32) {
    %c0_i32 = arith.constant 0 : i32
    %c0_i32_0 = arith.constant 0 : i32
    %c0_i32_1 = arith.constant 0 : i32
    return %c0_i32, %c0_i32_0 : i32, i32
  }
  func.func @transform_3(%arg0: i32) -> (i32, i32) {
    %c0_i32 = arith.constant 0 : i32
    %c0_i32_0 = arith.constant 0 : i32
    %c0_i32_1 = arith.constant 0 : i32
    return %c0_i32, %c0_i32_0 : i32, i32
  }
  func.func @transform_4(%arg0: i32) -> (i32, i32, i32) {
    %c0_i32 = arith.constant 0 : i32
    %c0_i32_0 = arith.constant 0 : i32
    %c0_i32_1 = arith.constant 0 : i32
    return %arg0, %c0_i32, %c0_i32_0 : i32, i32, i32
  }
  func.func @transform_5(%arg0: i32) -> (i32, i32, i32) {
    %c0_i32 = arith.constant 0 : i32
    %c0_i32_0 = arith.constant 0 : i32
    %c0_i32_1 = arith.constant 0 : i32
    return %arg0, %c0_i32, %c0_i32_0 : i32, i32, i32
  }
  func.func @transform_6(%arg0: i32) -> (i32, i32, i32) {
    %c0_i32 = arith.constant 0 : i32
    %c0_i32_0 = arith.constant 0 : i32
    %c0_i32_1 = arith.constant 0 : i32
    return %arg0, %c0_i32, %c0_i32_0 : i32, i32, i32
  }
}

</mosaic_0001>

<llo_original>
// kernel: tpu_custom_call.1
$region0: #{tpu_custom_call.1}
  #allocation0 [shape = 'u32[]', space=smem, size = 0x4, offset = 0x4, fixed_abs, tag = 'smem constant byte address 0x4 - core index']
  #allocation1 [shape = 'u32[144,128]{1,0:T(1,128)}', space=vmem, size = 0x12000, scoped, tag = 'internal scratch']
  %s0 = inlined_call_operand.hbm [shape: f32[8,16], index: 0, kind: input, shape index: {}]
  %s1 = inlined_call_operand.vmem [shape: f32[16,8], index: 1, kind: input, shape index: {}]
  %s2 = inlined_call_operand.hbm [shape: f32[8,16], index: 2, kind: input, shape index: {}]
  %s3 = inlined_call_operand.vmem [shape: f32[16,8], index: 3, kind: input, shape index: {}]
  %s4 = inlined_call_operand.hbm [shape: f32[8,16,16], index: 4, kind: input, shape index: {}]
  %s5 = inlined_call_operand.vmem [shape: f32[8,8,8], index: 5, kind: input, shape index: {}]
  %s6 = inlined_call_operand.hbm [shape: f32[8,16,16], index: 6, kind: output, shape index: {}]
  %s7 = sld [smem:[#allocation0]]
  $region46: #{tpu_custom_call.1} parent=0
    _
  %s9 = ssub.s32 1, %s7
  %s10 = scalar_select 0, %s9, %s7
  $region1: #{tpu_custom_call.1} parent=0
    #allocation2 [shape = 'u8[4096]{0}', space=vmem, size = 0x1000, scoped, tag = 'input window, operand 0, single buffered']
    #allocation3 [shape = 's32[1]{0}', space=sflag, size = 0x4, scoped, tag = 'scoped memory for tpu_custom_call.1']
    #allocation4 [shape = 's32[1]{0}', space=sflag, size = 0x4, scoped, tag = 'scoped memory for tpu_custom_call.1']
    #allocation5 [shape = 'u8[4096]{0}', space=vmem, size = 0x1000, scoped, tag = 'input window, operand 2, single buffered']
    #allocation6 [shape = 's32[1]{0}', space=sflag, size = 0x4, scoped, tag = 'scoped memory for tpu_custom_call.1']
    #allocation7 [shape = 'u8[65536]{0}', space=vmem, size = 0x10000, scoped, tag = 'input window, operand 4, single buffered']
    #allocation8 [shape = 'u8[65536]{0}', space=vmem, size = 0x10000, scoped, tag = 'output window, operand 0, single buffered']
    %11 = vsyncpa [#allocation3], 0
    %12 = vsyncpa [#allocation6], 0
    %13 = vsyncpa [#allocation4], 0
    // Predicated region
    $region2: #{tpu_custom_call.1} parent=1 // pred_check
      _
    $region3: #{tpu_custom_call.1} parent=1 // pred_check_branch
      %15 = sbr.rel (0) target = $region5
    $region4: #{tpu_custom_call.1} parent=1 // pred_region
      %s17 = ssub.s32 128, 128
      %18 = vsyncadd [#allocation3], %s17
      %s20 = sshll.u32 [#allocation2], 4
      %s21 = int_to_ptr.vmem [resolvable:$true] %s20
      %23 = dma.hbm_to_vmem [thread:$0]  %s0, 128, %s21, [#allocation3]
    $region5: #{tpu_custom_call.1} parent=1 // pred_fallthru
      _
    // Predicated region
    $region6: #{tpu_custom_call.1} parent=1 // pred_check
      _
    $region7: #{tpu_custom_call.1} parent=1 // pred_check_branch
      %25 = sbr.rel (0) target = $region9
    $region8: #{tpu_custom_call.1} parent=1 // pred_region
      _
    $region9: #{tpu_custom_call.1} parent=1 // pred_fallthru
      _
    // Predicated region
    $region10: #{tpu_custom_call.1} parent=1 // pred_check
      _
    $region11: #{tpu_custom_call.1} parent=1 // pred_check_branch
      %27 = sbr.rel (0) target = $region13
    $region12: #{tpu_custom_call.1} parent=1 // pred_region
      %s29 = ssub.s32 128, 128
      %30 = vsyncadd [#allocation6], %s29
      %s32 = sshll.u32 [#allocation5], 4
      %s33 = int_to_ptr.vmem [resolvable:$true] %s32
      %35 = dma.hbm_to_vmem [thread:$0]  %s2, 128, %s33, [#allocation6]
    $region13: #{tpu_custom_call.1} parent=1 // pred_fallthru
      _
    // Predicated region
    $region14: #{tpu_custom_call.1} parent=1 // pred_check
      _
    $region15: #{tpu_custom_call.1} parent=1 // pred_check_branch
      %37 = sbr.rel (0) target = $region17
    $region16: #{tpu_custom_call.1} parent=1 // pred_region
      _
    $region17: #{tpu_custom_call.1} parent=1 // pred_fallthru
      _
    // Predicated region
    $region18: #{tpu_custom_call.1} parent=1 // pred_check
      _
    $region19: #{tpu_custom_call.1} parent=1 // pred_check_branch
      %39 = sbr.rel (0) target = $region21
    $region20: #{tpu_custom_call.1} parent=1 // pred_region
      %s41 = ssub.s32 2048, 2048
      %42 = vsyncadd [#allocation6], %s41
      %s43 = sshll.u32 [#allocation7], 4
      %s44 = int_to_ptr.vmem [resolvable:$true] %s43
      %49 = dma.hbm_to_vmem [thread:$0]  %s4, 2048, %s44, [#allocation6], 128, 128, 8
    $region21: #{tpu_custom_call.1} parent=1 // pred_fallthru
      _
    // Predicated region
    $region22: #{tpu_custom_call.1} parent=1 // pred_check
      _
    $region23: #{tpu_custom_call.1} parent=1 // pred_check_branch
      %51 = sbr.rel (0) target = $region25
    $region24: #{tpu_custom_call.1} parent=1 // pred_region
      _
    $region25: #{tpu_custom_call.1} parent=1 // pred_fallthru
      _
    // Predicated region
    $region26: #{tpu_custom_call.1} parent=1 // pred_check
      _
    $region27: #{tpu_custom_call.1} parent=1 // pred_check_branch
      %53 = sbr.rel (0) target = $region29
    $region28: #{tpu_custom_call.1} parent=1 // pred_region
      %54 = dma.done [#allocation3], 128
    $region29: #{tpu_custom_call.1} parent=1 // pred_fallthru
      _
    // Predicated region
    $region30: #{tpu_custom_call.1} parent=1 // pred_check
      _
    $region31: #{tpu_custom_call.1} parent=1 // pred_check_branch
      %56 = sbr.rel (0) target = $region33
    $region32: #{tpu_custom_call.1} parent=1 // pred_region
      %57 = dma.done [#allocation6], 128
    $region33: #{tpu_custom_call.1} parent=1 // pred_fallthru
      _
    // Predicated region
    $region34: #{tpu_custom_call.1} parent=1 // pred_check
      _
    $region35: #{tpu_custom_call.1} parent=1 // pred_check_branch
      %59 = sbr.rel (0) target = $region37
    $region36: #{tpu_custom_call.1} parent=1 // pred_region
      %60 = dma.done [#allocation6], 2048
    $region37: #{tpu_custom_call.1} parent=1 // pred_fallthru
      _
    %v61 = vld [vmem:[#allocation7] sm:$0xff]
    %v62 = vld [vmem:[#allocation7 + $0x8] sm:$0xff]
    %v63 = vld [vmem:[#allocation7 + $0x10] sm:$0xff]
    %v64 = vld [vmem:[#allocation7 + $0x18] sm:$0xff]
    %v65 = vld [vmem:[#allocation7 + $0x20] sm:$0xff]
    %v66 = vld [vmem:[#allocation7 + $0x28] sm:$0xff]
    %v67 = vld [vmem:[#allocation7 + $0x30] sm:$0xff]
    %v68 = vld [vmem:[#allocation7 + $0x38] sm:$0xff]
    %v69 = vld [vmem:[#allocation7 + $0x40] sm:$0xff]
    %v70 = vld [vmem:[#allocation7 + $0x48] sm:$0xff]
    %v71 = vld [vmem:[#allocation7 + $0x50] sm:$0xff]
    %v72 = vld [vmem:[#allocation7 + $0x58] sm:$0xff]
    %v73 = vld [vmem:[#allocation7 + $0x60] sm:$0xff]
    %v74 = vld [vmem:[#allocation7 + $0x68] sm:$0xff]
    %v75 = vld [vmem:[#allocation7 + $0x70] sm:$0xff]
    %v76 = vld [vmem:[#allocation7 + $0x78] sm:$0xff]
    %v77 = vld [vmem:[%s5] sm:$0xff]
    %v78 = vld [vmem:[%s5 + $0x8] sm:$0xff]
    %v79 = vld [vmem:[%s5 + $0x10] sm:$0xff]
    %v80 = vld [vmem:[%s5 + $0x18] sm:$0xff]
    %v81 = vld [vmem:[%s5 + $0x20] sm:$0xff]
    %v82 = vld [vmem:[%s5 + $0x28] sm:$0xff]
    %v83 = vld [vmem:[%s5 + $0x30] sm:$0xff]
    %v84 = vld [vmem:[%s5 + $0x38] sm:$0xff]
    %v85 = vld [vmem:[#allocation2] sm:$0xff]
    %v86 = vld [vmem:[%s1] sm:$0xff]
    %v87 = vld [vmem:[%s1 + $0x8] sm:$0xff]
    %v88 = vld [vmem:[#allocation5] sm:$0xff]
    %v89 = vld [vmem:[%s3] sm:$0xff]
    %v90 = vld [vmem:[%s3 + $0x8] sm:$0xff]
    %vm91 = vcmask 130048
    %v93 = vsel %vm91, %v61, 0
    %v96 = vsel %vm91, %v62, 0
    %v99 = vsel %vm91, %v88, 0
    %101 = vmatprep.subr.mxu0 0.0
    %102 = vmatpush1.xpose.msra.mxu0 %v99
    %103 = vmatprep.subr.mxu0 0.0
    %104 = vmatpush1.xpose.msra.mxu0 0.0
    %105 = vmatprep.subr.mxu0 0.0
    %106 = vmatpush1.xpose.msra.mxu0 0.0
    %107 = vmatprep.subr.mxu0 0.0
    %108 = vmatpush1.xpose.msra.mxu0 0.0
    %109 = vmatprep.subr.mxu0 0.0
    %110 = vmatpush1.xpose.msra.mxu0 0.0
    %111 = vmatprep.subr.mxu0 0.0
    %112 = vmatpush1.xpose.msra.mxu0 0.0
    %113 = vmatprep.subr.mxu0 0.0
    %114 = vmatpush1.xpose.msra.mxu0 0.0
    %115 = vmatprep.subr.mxu0 0.0
    %116 = vmatpush1.xpose.msra.mxu0 0.0
    %117 = vmatprep.subr.mxu0 0.0
    %118 = vmatpush1.xpose.msra.mxu0 0.0
    %119 = vmatprep.subr.mxu0 0.0
    %120 = vmatpush1.xpose.msra.mxu0 0.0
    %121 = vmatprep.subr.mxu0 0.0
    %122 = vmatpush1.xpose.msra.mxu0 0.0
    %123 = vmatprep.subr.mxu0 0.0
    %124 = vmatpush1.xpose.msra.mxu0 0.0
    %125 = vmatprep.subr.mxu0 0.0
    %126 = vmatpush1.xpose.msra.mxu0 0.0
    %127 = vmatprep.subr.mxu0 0.0
    %128 = vmatpush1.xpose.msra.mxu0 0.0
    %129 = vmatprep.subr.mxu0 0.0
    %130 = vmatpush1.xpose.msra.mxu0 0.0
    %131 = vmatprep.subr.mxu0 0.0
    %132 = vmatpush1.xpose.msra.mxu0 0.0
    %133 = vmatprep.subr.mxu0 0.0
    %134 = vmatpush1.xpose.msra.mxu0 0.0
    %135 = vmatprep.subr.mxu0 0.0
    %136 = vmatpush1.xpose.msra.mxu0 0.0
    %137 = vmatprep.subr.mxu0 0.0
    %138 = vmatpush1.xpose.msra.mxu0 0.0
    %139 = vmatprep.subr.mxu0 0.0
    %140 = vmatpush1.xpose.msra.mxu0 0.0
    %141 = vmatprep.subr.mxu0 0.0
    %142 = vmatpush1.xpose.msra.mxu0 0.0
    %143 = vmatprep.subr.mxu0 0.0
    %144 = vmatpush1.xpose.msra.mxu0 0.0
    %145 = vmatprep.subr.mxu0 0.0
    %146 = vmatpush1.xpose.msra.mxu0 0.0
    %147 = vmatprep.subr.mxu0 0.0
    %148 = vmatpush1.xpose.msra.mxu0 0.0
    %149 = vmatprep.subr.mxu0 0.0
    %150 = vmatpush1.xpose.msra.mxu0 0.0
    %151 = vmatprep.subr.mxu0 0.0
    %152 = vmatpush1.xpose.msra.mxu0 0.0
    %153 = vmatprep.subr.mxu0 0.0
    %154 = vmatpush1.xpose.msra.mxu0 0.0
    %155 = vmatprep.subr.mxu0 0.0
    %156 = vmatpush1.xpose.msra.mxu0 0.0
    %157 = vmatprep.subr.mxu0 0.0
    %158 = vmatpush1.xpose.msra.mxu0 0.0
    %159 = vmatprep.subr.mxu0 0.0
    %160 = vmatpush1.xpose.msra.mxu0 0.0
    %161 = vmatprep.subr.mxu0 0.0
    %162 = vmatpush1.xpose.msra.mxu0 0.0
    %163 = vmatprep.subr.mxu0 0.0
    %164 = vmatpush1.xpose.msra.mxu0 0.0
    %165 = vmatprep.mubr.f32.mxu0 0.0
    %166 = vmatmul.mubr.f32.gmra.mrb[0].mxu0 %v93
    %v167 = vpop.f32.mrb[0].mxu0
    %v168 = vadd.f32 0.0, %v167
    %v169 = vpop.f32.mrb[0].mxu0
    %170 = vmatprep.mubr.f32.mxu0 0.0
    %171 = vmatmul.mubr.f32.gmra.mrb[0].mxu0 %v96
    %v172 = vpop.f32.mrb[0].mxu0
    %v173 = vadd.f32 0.0, %v172
    %v174 = vpop.f32.mrb[0].mxu0
    %175 = vdwg.mxu0
    %v177 = vsel %vm91, %v63, 0
    %v180 = vsel %vm91, %v64, 0
    %182 = vmatprep.subr.mxu0 0.0
    %183 = vmatpush1.xpose.msra.mxu0 %v99
    %184 = vmatprep.subr.mxu0 0.0
    %185 = vmatpush1.xpose.msra.mxu0 0.0
    %186 = vmatprep.subr.mxu0 0.0
    %187 = vmatpush1.xpose.msra.mxu0 0.0
    %188 = vmatprep.subr.mxu0 0.0
    %189 = vmatpush1.xpose.msra.mxu0 0.0
    %190 = vmatprep.subr.mxu0 0.0
    %191 = vmatpush1.xpose.msra.mxu0 0.0
    %192 = vmatprep.subr.mxu0 0.0
    %193 = vmatpush1.xpose.msra.mxu0 0.0
    %194 = vmatprep.subr.mxu0 0.0
    %195 = vmatpush1.xpose.msra.mxu0 0.0
    %196 = vmatprep.subr.mxu0 0.0
    %197 = vmatpush1.xpose.msra.mxu0 0.0
    %198 = vmatprep.subr.mxu0 0.0
    %199 = vmatpush1.xpose.msra.mxu0 0.0
    %200 = vmatprep.subr.mxu0 0.0
    %201 = vmatpush1.xpose.msra.mxu0 0.0
    %202 = vmatprep.subr.mxu0 0.0
    %203 = vmatpush1.xpose.msra.mxu0 0.0
    %204 = vmatprep.subr.mxu0 0.0
    %205 = vmatpush1.xpose.msra.mxu0 0.0
    %206 = vmatprep.subr.mxu0 0.0
    %207 = vmatpush1.xpose.msra.mxu0 0.0
    %208 = vmatprep.subr.mxu0 0.0
    %209 = vmatpush1.xpose.msra.mxu0 0.0
    %210 = vmatprep.subr.mxu0 0.0
    %211 = vmatpush1.xpose.msra.mxu0 0.0
    %212 = vmatprep.subr.mxu0 0.0
    %213 = vmatpush1.xpose.msra.mxu0 0.0
    %214 = vmatprep.subr.mxu0 0.0
    %215 = vmatpush1.xpose.msra.mxu0 0.0
    %216 = vmatprep.subr.mxu0 0.0
    %217 = vmatpush1.xpose.msra.mxu0 0.0
    %218 = vmatprep.subr.mxu0 0.0
    %219 = vmatpush1.xpose.msra.mxu0 0.0
    %220 = vmatprep.subr.mxu0 0.0
    %221 = vmatpush1.xpose.msra.mxu0 0.0
    %222 = vmatprep.subr.mxu0 0.0
    %223 = vmatpush1.xpose.msra.mxu0 0.0
    %224 = vmatprep.subr.mxu0 0.0
    %225 = vmatpush1.xpose.msra.mxu0 0.0
    %226 = vmatprep.subr.mxu0 0.0
    %227 = vmatpush1.xpose.msra.mxu0 0.0
    %228 = vmatprep.subr.mxu0 0.0
    %229 = vmatpush1.xpose.msra.mxu0 0.0
    %230 = vmatprep.subr.mxu0 0.0
    %231 = vmatpush1.xpose.msra.mxu0 0.0
    %232 = vmatprep.subr.mxu0 0.0
    %233 = vmatpush1.xpose.msra.mxu0 0.0
    %234 = vmatprep.subr.mxu0 0.0
    %235 = vmatpush1.xpose.msra.mxu0 0.0
    %236 = vmatprep.subr.mxu0 0.0
    %237 = vmatpush1.xpose.msra.mxu0 0.0
    %238 = vmatprep.subr.mxu0 0.0
    %239 = vmatpush1.xpose.msra.mxu0 0.0
    %240 = vmatprep.subr.mxu0 0.0
    %241 = vmatpush1.xpose.msra.mxu0 0.0
    %242 = vmatprep.subr.mxu0 0.0
    %243 = vmatpush1.xpose.msra.mxu0 0.0
    %244 = vmatprep.subr.mxu0 0.0
    %245 = vmatpush1.xpose.msra.mxu0 0.0
    %246 = vmatprep.mubr.f32.mxu0 0.0
    %247 = vmatmul.mubr.f32.gmra.mrb[0].mxu0 %v177
    %v248 = vpop.f32.mrb[0].mxu0
    %v249 = vadd.f32 0.0, %v248
    %v250 = vpop.f32.mrb[0].mxu0
    %251 = vmatprep.mubr.f32.mxu0 0.0
    %252 = vmatmul.mubr.f32.gmra.mrb[0].mxu0 %v180
    %v253 = vpop.f32.mrb[0].mxu0
    %v254 = vadd.f32 0.0, %v253
    %v255 = vpop.f32.mrb[0].mxu0
    %256 = vdwg.mxu0
    %v258 = vsel %vm91, %v65, 0
    %v261 = vsel %vm91, %v66, 0
    %263 = vmatprep.subr.mxu0 0.0
    %264 = vmatpush1.xpose.msra.mxu0 %v99
    %265 = vmatprep.subr.mxu0 0.0
    %266 = vmatpush1.xpose.msra.mxu0 0.0
    %267 = vmatprep.subr.mxu0 0.0
    %268 = vmatpush1.xpose.msra.mxu0 0.0
    %269 = vmatprep.subr.mxu0 0.0
    %270 = vmatpush1.xpose.msra.mxu0 0.0
    %271 = vmatprep.subr.mxu0 0.0
    %272 = vmatpush1.xpose.msra.mxu0 0.0
    %273 = vmatprep.subr.mxu0 0.0
    %274 = vmatpush1.xpose.msra.mxu0 0.0
    %275 = vmatprep.subr.mxu0 0.0
    %276 = vmatpush1.xpose.msra.mxu0 0.0
    %277 = vmatprep.subr.mxu0 0.0
    %278 = vmatpush1.xpose.msra.mxu0 0.0
    %279 = vmatprep.subr.mxu0 0.0
    %280 = vmatpush1.xpose.msra.mxu0 0.0
    %281 = vmatprep.subr.mxu0 0.0
    %282 = vmatpush1.xpose.msra.mxu0 0.0
    %283 = vmatprep.subr.mxu0 0.0
    %284 = vmatpush1.xpose.msra.mxu0 0.0
    %285 = vmatprep.subr.mxu0 0.0
    %286 = vmatpush1.xpose.msra.mxu0 0.0
    %287 = vmatprep.subr.mxu0 0.0
    %288 = vmatpush1.xpose.msra.mxu0 0.0
    %289 = vmatprep.subr.mxu0 0.0
    %290 = vmatpush1.xpose.msra.mxu0 0.0
    %291 = vmatprep.subr.mxu0 0.0
    %292 = vmatpush1.xpose.msra.mxu0 0.0
    %293 = vmatprep.subr.mxu0 0.0
    %294 = vmatpush1.xpose.msra.mxu0 0.0
    %295 = vmatprep.subr.mxu0 0.0
    %296 = vmatpush1.xpose.msra.mxu0 0.0
    %297 = vmatprep.subr.mxu0 0.0
    %298 = vmatpush1.xpose.msra.mxu0 0.0
    %299 = vmatprep.subr.mxu0 0.0
    %300 = vmatpush1.xpose.msra.mxu0 0.0
    %301 = vmatprep.subr.mxu0 0.0
    %302 = vmatpush1.xpose.msra.mxu0 0.0
    %303 = vmatprep.subr.mxu0 0.0
    %304 = vmatpush1.xpose.msra.mxu0 0.0
    %305 = vmatprep.subr.mxu0 0.0
    %306 = vmatpush1.xpose.msra.mxu0 0.0
    %307 = vmatprep.subr.mxu0 0.0
    %308 = vmatpush1.xpose.msra.mxu0 0.0
    %309 = vmatprep.subr.mxu0 0.0
    %310 = vmatpush1.xpose.msra.mxu0 0.0
    %311 = vmatprep.subr.mxu0 0.0
    %312 = vmatpush1.xpose.msra.mxu0 0.0
    %313 = vmatprep.subr.mxu0 0.0
    %314 = vmatpush1.xpose.msra.mxu0 0.0
    %315 = vmatprep.subr.mxu0 0.0
    %316 = vmatpush1.xpose.msra.mxu0 0.0
    %317 = vmatprep.subr.mxu0 0.0
    %318 = vmatpush1.xpose.msra.mxu0 0.0
    %319 = vmatprep.subr.mxu0 0.0
    %320 = vmatpush1.xpose.msra.mxu0 0.0
    %321 = vmatprep.subr.mxu0 0.0
    %322 = vmatpush1.xpose.msra.mxu0 0.0
    %323 = vmatprep.subr.mxu0 0.0
    %324 = vmatpush1.xpose.msra.mxu0 0.0
    %325 = vmatprep.subr.mxu0 0.0
    %326 = vmatpush1.xpose.msra.mxu0 0.0
    %327 = vmatprep.mubr.f32.mxu0 0.0
    %328 = vmatmul.mubr.f32.gmra.mrb[0].mxu0 %v258
    %v329 = vpop.f32.mrb[0].mxu0
    %v330 = vadd.f32 0.0, %v329
    %v331 = vpop.f32.mrb[0].mxu0
    %332 = vmatprep.mubr.f32.mxu0 0.0
    %333 = vmatmul.mubr.f32.gmra.mrb[0].mxu0 %v261
    %v334 = vpop.f32.mrb[0].mxu0
    %v335 = vadd.f32 0.0, %v334
    %v336 = vpop.f32.mrb[0].mxu0
    %337 = vdwg.mxu0
    %v339 = vsel %vm91, %v67, 0
    %v342 = vsel %vm91, %v68, 0
    %344 = vmatprep.subr.mxu0 0.0
    %345 = vmatpush1.xpose.msra.mxu0 %v99
    %346 = vmatprep.subr.mxu0 0.0
    %347 = vmatpush1.xpose.msra.mxu0 0.0
    %348 = vmatprep.subr.mxu0 0.0
    %349 = vmatpush1.xpose.msra.mxu0 0.0
    %350 = vmatprep.subr.mxu0 0.0
    %351 = vmatpush1.xpose.msra.mxu0 0.0
    %352 = vmatprep.subr.mxu0 0.0
    %353 = vmatpush1.xpose.msra.mxu0 0.0
    %354 = vmatprep.subr.mxu0 0.0
    %355 = vmatpush1.xpose.msra.mxu0 0.0
    %356 = vmatprep.subr.mxu0 0.0
    %357 = vmatpush1.xpose.msra.mxu0 0.0
    %358 = vmatprep.subr.mxu0 0.0
    %359 = vmatpush1.xpose.msra.mxu0 0.0
    %360 = vmatprep.subr.mxu0 0.0
    %361 = vmatpush1.xpose.msra.mxu0 0.0
    %362 = vmatprep.subr.mxu0 0.0
    %363 = vmatpush1.xpose.msra.mxu0 0.0
    %364 = vmatprep.subr.mxu0 0.0
    %365 = vmatpush1.xpose.msra.mxu0 0.0
    %366 = vmatprep.subr.mxu0 0.0
    %367 = vmatpush1.xpose.msra.mxu0 0.0
    %368 = vmatprep.subr.mxu0 0.0
    %369 = vmatpush1.xpose.msra.mxu0 0.0
    %370 = vmatprep.subr.mxu0 0.0
    %371 = vmatpush1.xpose.msra.mxu0 0.0
    %372 = vmatprep.subr.mxu0 0.0
    %373 = vmatpush1.xpose.msra.mxu0 0.0
    %374 = vmatprep.subr.mxu0 0.0
    %375 = vmatpush1.xpose.msra.mxu0 0.0
    %376 = vmatprep.subr.mxu0 0.0
    %377 = vmatpush1.xpose.msra.mxu0 0.0
    %378 = vmatprep.subr.mxu0 0.0
    %379 = vmatpush1.xpose.msra.mxu0 0.0
    %380 = vmatprep.subr.mxu0 0.0
    %381 = vmatpush1.xpose.msra.mxu0 0.0
    %382 = vmatprep.subr.mxu0 0.0
    %383 = vmatpush1.xpose.msra.mxu0 0.0
    %384 = vmatprep.subr.mxu0 0.0
    %385 = vmatpush1.xpose.msra.mxu0 0.0
    %386 = vmatprep.subr.mxu0 0.0
    %387 = vmatpush1.xpose.msra.mxu0 0.0
    %388 = vmatprep.subr.mxu0 0.0
    %389 = vmatpush1.xpose.msra.mxu0 0.0
    %390 = vmatprep.subr.mxu0 0.0
    %391 = vmatpush1.xpose.msra.mxu0 0.0
    %392 = vmatprep.subr.mxu0 0.0
    %393 = vmatpush1.xpose.msra.mxu0 0.0
    %394 = vmatprep.subr.mxu0 0.0
    %395 = vmatpush1.xpose.msra.mxu0 0.0
    %396 = vmatprep.subr.mxu0 0.0
    %397 = vmatpush1.xpose.msra.mxu0 0.0
    %398 = vmatprep.subr.mxu0 0.0
    %399 = vmatpush1.xpose.msra.mxu0 0.0
    %400 = vmatprep.subr.mxu0 0.0
    %401 = vmatpush1.xpose.msra.mxu0 0.0
    %402 = vmatprep.subr.mxu0 0.0
    %403 = vmatpush1.xpose.msra.mxu0 0.0
    %404 = vmatprep.subr.mxu0 0.0
    %405 = vmatpush1.xpose.msra.mxu0 0.0
    %406 = vmatprep.subr.mxu0 0.0
    %407 = vmatpush1.xpose.msra.mxu0 0.0
    %408 = vmatprep.mubr.f32.mxu0 0.0
    %409 = vmatmul.mubr.f32.gmra.mrb[0].mxu0 %v339
    %v410 = vpop.f32.mrb[0].mxu0
    %v411 = vadd.f32 0.0, %v410
    %v412 = vpop.f32.mrb[0].mxu0
    %413 = vmatprep.mubr.f32.mxu0 0.0
    %414 = vmatmul.mubr.f32.gmra.mrb[0].mxu0 %v342
    %v415 = vpop.f32.mrb[0].mxu0
    %v416 = vadd.f32 0.0, %v415
    %v417 = vpop.f32.mrb[0].mxu0
    %418 = vdwg.mxu0
    %v420 = vsel %vm91, %v69, 0
    %v423 = vsel %vm91, %v70, 0
    %425 = vmatprep.subr.mxu0 0.0
    %426 = vmatpush1.xpose.msra.mxu0 %v99
    %427 = vmatprep.subr.mxu0 0.0
    %428 = vmatpush1.xpose.msra.mxu0 0.0
    %429 = vmatprep.subr.mxu0 0.0
    %430 = vmatpush1.xpose.msra.mxu0 0.0
    %431 = vmatprep.subr.mxu0 0.0
    %432 = vmatpush1.xpose.msra.mxu0 0.0
    %433 = vmatprep.subr.mxu0 0.0
    %434 = vmatpush1.xpose.msra.mxu0 0.0
    %435 = vmatprep.subr.mxu0 0.0
    %436 = vmatpush1.xpose.msra.mxu0 0.0
    %437 = vmatprep.subr.mxu0 0.0
    %438 = vmatpush1.xpose.msra.mxu0 0.0
    %439 = vmatprep.subr.mxu0 0.0
    %440 = vmatpush1.xpose.msra.mxu0 0.0
    %441 = vmatprep.subr.mxu0 0.0
    %442 = vmatpush1.xpose.msra.mxu0 0.0
    %443 = vmatprep.subr.mxu0 0.0
    %444 = vmatpush1.xpose.msra.mxu0 0.0
    %445 = vmatprep.subr.mxu0 0.0
    %446 = vmatpush1.xpose.msra.mxu0 0.0
    %447 = vmatprep.subr.mxu0 0.0
    %448 = vmatpush1.xpose.msra.mxu0 0.0
    %449 = vmatprep.subr.mxu0 0.0
    %450 = vmatpush1.xpose.msra.mxu0 0.0
    %451 = vmatprep.subr.mxu0 0.0
    %452 = vmatpush1.xpose.msra.mxu0 0.0
    %453 = vmatprep.subr.mxu0 0.0
    %454 = vmatpush1.xpose.msra.mxu0 0.0
    %455 = vmatprep.subr.mxu0 0.0
    %456 = vmatpush1.xpose.msra.mxu0 0.0
    %457 = vmatprep.subr.mxu0 0.0
    %458 = vmatpush1.xpose.msra.mxu0 0.0
    %459 = vmatprep.subr.mxu0 0.0
    %460 = vmatpush1.xpose.msra.mxu0 0.0
    %461 = vmatprep.subr.mxu0 0.0
    %462 = vmatpush1.xpose.msra.mxu0 0.0
    %463 = vmatprep.subr.mxu0 0.0
    %464 = vmatpush1.xpose.msra.mxu0 0.0
    %465 = vmatprep.subr.mxu0 0.0
    %466 = vmatpush1.xpose.msra.mxu0 0.0
    %467 = vmatprep.subr.mxu0 0.0
    %468 = vmatpush1.xpose.msra.mxu0 0.0
    %469 = vmatprep.subr.mxu0 0.0
    %470 = vmatpush1.xpose.msra.mxu0 0.0
    %471 = vmatprep.subr.mxu0 0.0
    %472 = vmatpush1.xpose.msra.mxu0 0.0
    %473 = vmatprep.subr.mxu0 0.0
    %474 = vmatpush1.xpose.msra.mxu0 0.0
    %475 = vmatprep.subr.mxu0 0.0
    %476 = vmatpush1.xpose.msra.mxu0 0.0
    %477 = vmatprep.subr.mxu0 0.0
    %478 = vmatpush1.xpose.msra.mxu0 0.0
    %479 = vmatprep.subr.mxu0 0.0
    %480 = vmatpush1.xpose.msra.mxu0 0.0
    %481 = vmatprep.subr.mxu0 0.0
    %482 = vmatpush1.xpose.msra.mxu0 0.0
    %483 = vmatprep.subr.mxu0 0.0
    %484 = vmatpush1.xpose.msra.mxu0 0.0
    %485 = vmatprep.subr.mxu0 0.0
    %486 = vmatpush1.xpose.msra.mxu0 0.0
    %487 = vmatprep.subr.mxu0 0.0
    %488 = vmatpush1.xpose.msra.mxu0 0.0
    %489 = vmatprep.mubr.f32.mxu0 0.0
    %490 = vmatmul.mubr.f32.gmra.mrb[0].mxu0 %v420
    %v491 = vpop.f32.mrb[0].mxu0
    %v492 = vadd.f32 0.0, %v491
    %v493 = vpop.f32.mrb[0].mxu0
    %494 = vmatprep.mubr.f32.mxu0 0.0
    %495 = vmatmul.mubr.f32.gmra.mrb[0].mxu0 %v423
    %v496 = vpop.f32.mrb[0].mxu0
    %v497 = vadd.f32 0.0, %v496
    %v498 = vpop.f32.mrb[0].mxu0
    %499 = vdwg.mxu0
    %v501 = vsel %vm91, %v71, 0
    %v504 = vsel %vm91, %v72, 0
    %506 = vmatprep.subr.mxu0 0.0
    %507 = vmatpush1.xpose.msra.mxu0 %v99
    %508 = vmatprep.subr.mxu0 0.0
    %509 = vmatpush1.xpose.msra.mxu0 0.0
    %510 = vmatprep.subr.mxu0 0.0
    %511 = vmatpush1.xpose.msra.mxu0 0.0
    %512 = vmatprep.subr.mxu0 0.0
    %513 = vmatpush1.xpose.msra.mxu0 0.0
    %514 = vmatprep.subr.mxu0 0.0
    %515 = vmatpush1.xpose.msra.mxu0 0.0
    %516 = vmatprep.subr.mxu0 0.0
    %517 = vmatpush1.xpose.msra.mxu0 0.0
    %518 = vmatprep.subr.mxu0 0.0
    %519 = vmatpush1.xpose.msra.mxu0 0.0
    %520 = vmatprep.subr.mxu0 0.0
    %521 = vmatpush1.xpose.msra.mxu0 0.0
    %522 = vmatprep.subr.mxu0 0.0
    %523 = vmatpush1.xpose.msra.mxu0 0.0
    %524 = vmatprep.subr.mxu0 0.0
    %525 = vmatpush1.xpose.msra.mxu0 0.0
    %526 = vmatprep.subr.mxu0 0.0
    %527 = vmatpush1.xpose.msra.mxu0 0.0
    %528 = vmatprep.subr.mxu0 0.0
    %529 = vmatpush1.xpose.msra.mxu0 0.0
    %530 = vmatprep.subr.mxu0 0.0
    %531 = vmatpush1.xpose.msra.mxu0 0.0
    %532 = vmatprep.subr.mxu0 0.0
    %533 = vmatpush1.xpose.msra.mxu0 0.0
    %534 = vmatprep.subr.mxu0 0.0
    %535 = vmatpush1.xpose.msra.mxu0 0.0
    %536 = vmatprep.subr.mxu0 0.0
    %537 = vmatpush1.xpose.msra.mxu0 0.0
    %538 = vmatprep.subr.mxu0 0.0
    %539 = vmatpush1.xpose.msra.mxu0 0.0
    %540 = vmatprep.subr.mxu0 0.0
    %541 = vmatpush1.xpose.msra.mxu0 0.0
    %542 = vmatprep.subr.mxu0 0.0
    %543 = vmatpush1.xpose.msra.mxu0 0.0
    %544 = vmatprep.subr.mxu0 0.0
    %545 = vmatpush1.xpose.msra.mxu0 0.0
    %546 = vmatprep.subr.mxu0 0.0
    %547 = vmatpush1.xpose.msra.mxu0 0.0
    %548 = vmatprep.subr.mxu0 0.0
    %549 = vmatpush1.xpose.msra.mxu0 0.0
    %550 = vmatprep.subr.mxu0 0.0
    %551 = vmatpush1.xpose.msra.mxu0 0.0
    %552 = vmatprep.subr.mxu0 0.0
    %553 = vmatpush1.xpose.msra.mxu0 0.0
    %554 = vmatprep.subr.mxu0 0.0
    %555 = vmatpush1.xpose.msra.mxu0 0.0
    %556 = vmatprep.subr.mxu0 0.0
    %557 = vmatpush1.xpose.msra.mxu0 0.0
    %558 = vmatprep.subr.mxu0 0.0
    %559 = vmatpush1.xpose.msra.mxu0 0.0
    %560 = vmatprep.subr.mxu0 0.0
    %561 = vmatpush1.xpose.msra.mxu0 0.0
    %562 = vmatprep.subr.mxu0 0.0
    %563 = vmatpush1.xpose.msra.mxu0 0.0
    %564 = vmatprep.subr.mxu0 0.0
    %565 = vmatpush1.xpose.msra.mxu0 0.0
    %566 = vmatprep.subr.mxu0 0.0
    %567 = vmatpush1.xpose.msra.mxu0 0.0
    %568 = vmatprep.subr.mxu0 0.0
    %569 = vmatpush1.xpose.msra.mxu0 0.0
    %570 = vmatprep.mubr.f32.mxu0 0.0
    %571 = vmatmul.mubr.f32.gmra.mrb[0].mxu0 %v501
    %v572 = vpop.f32.mrb[0].mxu0
    %v573 = vadd.f32 0.0, %v572
    %v574 = vpop.f32.mrb[0].mxu0
    %575 = vmatprep.mubr.f32.mxu0 0.0
    %576 = vmatmul.mubr.f32.gmra.mrb[0].mxu0 %v504
    %v577 = vpop.f32.mrb[0].mxu0
    %v578 = vadd.f32 0.0, %v577
    %v579 = vpop.f32.mrb[0].mxu0
    %580 = vdwg.mxu0
    %v582 = vsel %vm91, %v73, 0
    %v585 = vsel %vm91, %v74, 0
    %587 = vmatprep.subr.mxu0 0.0
    %588 = vmatpush1.xpose.msra.mxu0 %v99
    %589 = vmatprep.subr.mxu0 0.0
    %590 = vmatpush1.xpose.msra.mxu0 0.0
    %591 = vmatprep.subr.mxu0 0.0
    %592 = vmatpush1.xpose.msra.mxu0 0.0
    %593 = vmatprep.subr.mxu0 0.0
    %594 = vmatpush1.xpose.msra.mxu0 0.0
    %595 = vmatprep.subr.mxu0 0.0
    %596 = vmatpush1.xpose.msra.mxu0 0.0
    %597 = vmatprep.subr.mxu0 0.0
    %598 = vmatpush1.xpose.msra.mxu0 0.0
    %599 = vmatprep.subr.mxu0 0.0
    %600 = vmatpush1.xpose.msra.mxu0 0.0
    %601 = vmatprep.subr.mxu0 0.0
    %602 = vmatpush1.xpose.msra.mxu0 0.0
    %603 = vmatprep.subr.mxu0 0.0
    %604 = vmatpush1.xpose.msra.mxu0 0.0
    %605 = vmatprep.subr.mxu0 0.0
    %606 = vmatpush1.xpose.msra.mxu0 0.0
    %607 = vmatprep.subr.mxu0 0.0
    %608 = vmatpush1.xpose.msra.mxu0 0.0
    %609 = vmatprep.subr.mxu0 0.0
    %610 = vmatpush1.xpose.msra.mxu0 0.0
    %611 = vmatprep.subr.mxu0 0.0
    %612 = vmatpush1.xpose.msra.mxu0 0.0
    %613 = vmatprep.subr.mxu0 0.0
    %614 = vmatpush1.xpose.msra.mxu0 0.0
    %615 = vmatprep.subr.mxu0 0.0
    %616 = vmatpush1.xpose.msra.mxu0 0.0
    %617 = vmatprep.subr.mxu0 0.0
    %618 = vmatpush1.xpose.msra.mxu0 0.0
    %619 = vmatprep.subr.mxu0 0.0
    %620 = vmatpush1.xpose.msra.mxu0 0.0
    %621 = vmatprep.subr.mxu0 0.0
    %622 = vmatpush1.xpose.msra.mxu0 0.0
    %623 = vmatprep.subr.mxu0 0.0
    %624 = vmatpush1.xpose.msra.mxu0 0.0
    %625 = vmatprep.subr.mxu0 0.0
    %626 = vmatpush1.xpose.msra.mxu0 0.0
    %627 = vmatprep.subr.mxu0 0.0
    %628 = vmatpush1.xpose.msra.mxu0 0.0
    %629 = vmatprep.subr.mxu0 0.0
    %630 = vmatpush1.xpose.msra.mxu0 0.0
    %631 = vmatprep.subr.mxu0 0.0
    %632 = vmatpush1.xpose.msra.mxu0 0.0
    %633 = vmatprep.subr.mxu0 0.0
    %634 = vmatpush1.xpose.msra.mxu0 0.0
    %635 = vmatprep.subr.mxu0 0.0
    %636 = vmatpush1.xpose.msra.mxu0 0.0
    %637 = vmatprep.subr.mxu0 0.0
    %638 = vmatpush1.xpose.msra.mxu0 0.0
    %639 = vmatprep.subr.mxu0 0.0
    %640 = vmatpush1.xpose.msra.mxu0 0.0
    %641 = vmatprep.subr.mxu0 0.0
    %642 = vmatpush1.xpose.msra.mxu0 0.0
    %643 = vmatprep.subr.mxu0 0.0
    %644 = vmatpush1.xpose.msra.mxu0 0.0
    %645 = vmatprep.subr.mxu0 0.0
    %646 = vmatpush1.xpose.msra.mxu0 0.0
    %647 = vmatprep.subr.mxu0 0.0
    %648 = vmatpush1.xpose.msra.mxu0 0.0
    %649 = vmatprep.subr.mxu0 0.0
    %650 = vmatpush1.xpose.msra.mxu0 0.0
    %651 = vmatprep.mubr.f32.mxu0 0.0
    %652 = vmatmul.mubr.f32.gmra.mrb[0].mxu0 %v582
    %v653 = vpop.f32.mrb[0].mxu0
    %v654 = vadd.f32 0.0, %v653
    %v655 = vpop.f32.mrb[0].mxu0
    %656 = vmatprep.mubr.f32.mxu0 0.0
    %657 = vmatmul.mubr.f32.gmra.mrb[0].mxu0 %v585
    %v658 = vpop.f32.mrb[0].mxu0
    %v659 = vadd.f32 0.0, %v658
    %v660 = vpop.f32.mrb[0].mxu0
    %661 = vdwg.mxu0
    %v663 = vsel %vm91, %v75, 0
    %v666 = vsel %vm91, %v76, 0
    %668 = vmatprep.subr.mxu0 0.0
    %669 = vmatpush1.xpose.msra.mxu0 %v99
    %670 = vmatprep.subr.mxu0 0.0
    %671 = vmatpush1.xpose.msra.mxu0 0.0
    %672 = vmatprep.subr.mxu0 0.0
    %673 = vmatpush1.xpose.msra.mxu0 0.0
    %674 = vmatprep.subr.mxu0 0.0
    %675 = vmatpush1.xpose.msra.mxu0 0.0
    %676 = vmatprep.subr.mxu0 0.0
    %677 = vmatpush1.xpose.msra.mxu0 0.0
    %678 = vmatprep.subr.mxu0 0.0
    %679 = vmatpush1.xpose.msra.mxu0 0.0
    %680 = vmatprep.subr.mxu0 0.0
    %681 = vmatpush1.xpose.msra.mxu0 0.0
    %682 = vmatprep.subr.mxu0 0.0
    %683 = vmatpush1.xpose.msra.mxu0 0.0
    %684 = vmatprep.subr.mxu0 0.0
    %685 = vmatpush1.xpose.msra.mxu0 0.0
    %686 = vmatprep.subr.mxu0 0.0
    %687 = vmatpush1.xpose.msra.mxu0 0.0
    %688 = vmatprep.subr.mxu0 0.0
    %689 = vmatpush1.xpose.msra.mxu0 0.0
    %690 = vmatprep.subr.mxu0 0.0
    %691 = vmatpush1.xpose.msra.mxu0 0.0
    %692 = vmatprep.subr.mxu0 0.0
    %693 = vmatpush1.xpose.msra.mxu0 0.0
    %694 = vmatprep.subr.mxu0 0.0
    %695 = vmatpush1.xpose.msra.mxu0 0.0
    %696 = vmatprep.subr.mxu0 0.0
    %697 = vmatpush1.xpose.msra.mxu0 0.0
    %698 = vmatprep.subr.mxu0 0.0
    %699 = vmatpush1.xpose.msra.mxu0 0.0
    %700 = vmatprep.subr.mxu0 0.0
    %701 = vmatpush1.xpose.msra.mxu0 0.0
    %702 = vmatprep.subr.mxu0 0.0
    %703 = vmatpush1.xpose.msra.mxu0 0.0
    %704 = vmatprep.subr.mxu0 0.0
    %705 = vmatpush1.xpose.msra.mxu0 0.0
    %706 = vmatprep.subr.mxu0 0.0
    %707 = vmatpush1.xpose.msra.mxu0 0.0
    %708 = vmatprep.subr.mxu0 0.0
    %709 = vmatpush1.xpose.msra.mxu0 0.0
    %710 = vmatprep.subr.mxu0 0.0
    %711 = vmatpush1.xpose.msra.mxu0 0.0
    %712 = vmatprep.subr.mxu0 0.0
    %713 = vmatpush1.xpose.msra.mxu0 0.0
    %714 = vmatprep.subr.mxu0 0.0
    %715 = vmatpush1.xpose.msra.mxu0 0.0
    %716 = vmatprep.subr.mxu0 0.0
    %717 = vmatpush1.xpose.msra.mxu0 0.0
    %718 = vmatprep.subr.mxu0 0.0
    %719 = vmatpush1.xpose.msra.mxu0 0.0
    %720 = vmatprep.subr.mxu0 0.0
    %721 = vmatpush1.xpose.msra.mxu0 0.0
    %722 = vmatprep.subr.mxu0 0.0
    %723 = vmatpush1.xpose.msra.mxu0 0.0
    %724 = vmatprep.subr.mxu0 0.0
    %725 = vmatpush1.xpose.msra.mxu0 0.0
    %726 = vmatprep.subr.mxu0 0.0
    %727 = vmatpush1.xpose.msra.mxu0 0.0
    %728 = vmatprep.subr.mxu0 0.0
    %729 = vmatpush1.xpose.msra.mxu0 0.0
    %730 = vmatprep.subr.mxu0 0.0
    %731 = vmatpush1.xpose.msra.mxu0 0.0
    %732 = vmatprep.mubr.f32.mxu0 0.0
    %733 = vmatmul.mubr.f32.gmra.mrb[0].mxu0 %v663
    %v734 = vpop.f32.mrb[0].mxu0
    %v735 = vadd.f32 0.0, %v734
    %v736 = vpop.f32.mrb[0].mxu0
    %737 = vmatprep.mubr.f32.mxu0 0.0
    %738 = vmatmul.mubr.f32.gmra.mrb[0].mxu0 %v666
    %v739 = vpop.f32.mrb[0].mxu0
    %v740 = vadd.f32 0.0, %v739
    %v741 = vpop.f32.mrb[0].mxu0
    %742 = vdwg.mxu0
    %v744 = vsel %vm91, %v85, 0
    %746 = vmatprep.subr.mxu0 0.0
    %747 = vmatpush1.msra.mxu0 %v168
    %748 = vmatprep.subr.mxu0 0.0
    %749 = vmatpush1.msra.mxu0 %v173
    %750 = vmatprep.subr.mxu0 0.0
    %751 = vmatpush1.msra.mxu0 0.0
    %752 = vmatprep.subr.mxu0 0.0
    %753 = vmatpush1.msra.mxu0 0.0
    %754 = vmatprep.subr.mxu0 0.0
    %755 = vmatpush1.msra.mxu0 0.0
    %756 = vmatprep.subr.mxu0 0.0
    %757 = vmatpush1.msra.mxu0 0.0
    %758 = vmatprep.subr.mxu0 0.0
    %759 = vmatpush1.msra.mxu0 0.0
    %760 = vmatprep.subr.mxu0 0.0
    %761 = vmatpush1.msra.mxu0 0.0
    %762 = vmatprep.subr.mxu0 0.0
    %763 = vmatpush1.msra.mxu0 0.0
    %764 = vmatprep.subr.mxu0 0.0
    %765 = vmatpush1.msra.mxu0 0.0
    %766 = vmatprep.subr.mxu0 0.0
    %767 = vmatpush1.msra.mxu0 0.0
    %768 = vmatprep.subr.mxu0 0.0
    %769 = vmatpush1.msra.mxu0 0.0
    %770 = vmatprep.subr.mxu0 0.0
    %771 = vmatpush1.msra.mxu0 0.0
    %772 = vmatprep.subr.mxu0 0.0
    %773 = vmatpush1.msra.mxu0 0.0
    %774 = vmatprep.subr.mxu0 0.0
    %775 = vmatpush1.msra.mxu0 0.0
    %776 = vmatprep.subr.mxu0 0.0
    %777 = vmatpush1.msra.mxu0 0.0
    %778 = vmatprep.subr.mxu0 0.0
    %779 = vmatpush1.msra.mxu0 0.0
    %780 = vmatprep.subr.mxu0 0.0
    %781 = vmatpush1.msra.mxu0 0.0
    %782 = vmatprep.subr.mxu0 0.0
    %783 = vmatpush1.msra.mxu0 0.0
    %784 = vmatprep.subr.mxu0 0.0
    %785 = vmatpush1.msra.mxu0 0.0
    %786 = vmatprep.subr.mxu0 0.0
    %787 = vmatpush1.msra.mxu0 0.0
    %788 = vmatprep.subr.mxu0 0.0
    %789 = vmatpush1.msra.mxu0 0.0
    %790 = vmatprep.subr.mxu0 0.0
    %791 = vmatpush1.msra.mxu0 0.0
    %792 = vmatprep.subr.mxu0 0.0
    %793 = vmatpush1.msra.mxu0 0.0
    %794 = vmatprep.subr.mxu0 0.0
    %795 = vmatpush1.msra.mxu0 0.0
    %796 = vmatprep.subr.mxu0 0.0
    %797 = vmatpush1.msra.mxu0 0.0
    %798 = vmatprep.subr.mxu0 0.0
    %799 = vmatpush1.msra.mxu0 0.0
    %800 = vmatprep.subr.mxu0 0.0
    %801 = vmatpush1.msra.mxu0 0.0
    %802 = vmatprep.subr.mxu0 0.0
    %803 = vmatpush1.msra.mxu0 0.0
    %804 = vmatprep.subr.mxu0 0.0
    %805 = vmatpush1.msra.mxu0 0.0
    %806 = vmatprep.subr.mxu0 0.0
    %807 = vmatpush1.msra.mxu0 0.0
    %808 = vmatprep.subr.mxu0 0.0
    %809 = vmatpush1.msra.mxu0 0.0
    %810 = vmatprep.mubr.f32.mxu0 0.0
    %811 = vmatmul.mubr.f32.gmra.mrb[0].mxu0 %v744
    %v812 = vpop.f32.mrb[0].mxu0
    %v813 = vadd.f32 1e-05, %v812
    %v814 = vpop.f32.mrb[0].mxu0
    %815 = vdwg.mxu0
    %816 = vmatprep.subr.mxu0 0.0
    %817 = vmatpush1.msra.mxu0 %v249
    %818 = vmatprep.subr.mxu0 0.0
    %819 = vmatpush1.msra.mxu0 %v254
    %820 = vmatprep.subr.mxu0 0.0
    %821 = vmatpush1.msra.mxu0 0.0
    %822 = vmatprep.subr.mxu0 0.0
    %823 = vmatpush1.msra.mxu0 0.0
    %824 = vmatprep.subr.mxu0 0.0
    %825 = vmatpush1.msra.mxu0 0.0
    %826 = vmatprep.subr.mxu0 0.0
    %827 = vmatpush1.msra.mxu0 0.0
    %828 = vmatprep.subr.mxu0 0.0
    %829 = vmatpush1.msra.mxu0 0.0
    %830 = vmatprep.subr.mxu0 0.0
    %831 = vmatpush1.msra.mxu0 0.0
    %832 = vmatprep.subr.mxu0 0.0
    %833 = vmatpush1.msra.mxu0 0.0
    %834 = vmatprep.subr.mxu0 0.0
    %835 = vmatpush1.msra.mxu0 0.0
    %836 = vmatprep.subr.mxu0 0.0
    %837 = vmatpush1.msra.mxu0 0.0
    %838 = vmatprep.subr.mxu0 0.0
    %839 = vmatpush1.msra.mxu0 0.0
    %840 = vmatprep.subr.mxu0 0.0
    %841 = vmatpush1.msra.mxu0 0.0
    %842 = vmatprep.subr.mxu0 0.0
    %843 = vmatpush1.msra.mxu0 0.0
    %844 = vmatprep.subr.mxu0 0.0
    %845 = vmatpush1.msra.mxu0 0.0
    %846 = vmatprep.subr.mxu0 0.0
    %847 = vmatpush1.msra.mxu0 0.0
    %848 = vmatprep.subr.mxu0 0.0
    %849 = vmatpush1.msra.mxu0 0.0
    %850 = vmatprep.subr.mxu0 0.0
    %851 = vmatpush1.msra.mxu0 0.0
    %852 = vmatprep.subr.mxu0 0.0
    %853 = vmatpush1.msra.mxu0 0.0
    %854 = vmatprep.subr.mxu0 0.0
    %855 = vmatpush1.msra.mxu0 0.0
    %856 = vmatprep.subr.mxu0 0.0
    %857 = vmatpush1.msra.mxu0 0.0
    %858 = vmatprep.subr.mxu0 0.0
    %859 = vmatpush1.msra.mxu0 0.0
    %860 = vmatprep.subr.mxu0 0.0
    %861 = vmatpush1.msra.mxu0 0.0
    %862 = vmatprep.subr.mxu0 0.0
    %863 = vmatpush1.msra.mxu0 0.0
    %864 = vmatprep.subr.mxu0 0.0
    %865 = vmatpush1.msra.mxu0 0.0
    %866 = vmatprep.subr.mxu0 0.0
    %867 = vmatpush1.msra.mxu0 0.0
    %868 = vmatprep.subr.mxu0 0.0
    %869 = vmatpush1.msra.mxu0 0.0
    %870 = vmatprep.subr.mxu0 0.0
    %871 = vmatpush1.msra.mxu0 0.0
    %872 = vmatprep.subr.mxu0 0.0
    %873 = vmatpush1.msra.mxu0 0.0
    %874 = vmatprep.subr.mxu0 0.0
    %875 = vmatpush1.msra.mxu0 0.0
    %876 = vmatprep.subr.mxu0 0.0
    %877 = vmatpush1.msra.mxu0 0.0
    %878 = vmatprep.subr.mxu0 0.0
    %879 = vmatpush1.msra.mxu0 0.0
    %880 = vmatprep.mubr.f32.mxu0 0.0
    %881 = vmatmul.mubr.f32.gmra.mrb[0].mxu0 %v744
    %v882 = vpop.f32.mrb[0].mxu0
    %v883 = vadd.f32 1e-05, %v882
    %v884 = vpop.f32.mrb[0].mxu0
    %885 = vdwg.mxu0
    %886 = vmatprep.subr.mxu0 0.0
    %887 = vmatpush1.msra.mxu0 %v330
    %888 = vmatprep.subr.mxu0 0.0
    %889 = vmatpush1.msra.mxu0 %v335
    %890 = vmatprep.subr.mxu0 0.0
    %891 = vmatpush1.msra.mxu0 0.0
    %892 = vmatprep.subr.mxu0 0.0
    %893 = vmatpush1.msra.mxu0 0.0
    %894 = vmatprep.subr.mxu0 0.0
    %895 = vmatpush1.msra.mxu0 0.0
    %896 = vmatprep.subr.mxu0 0.0
    %897 = vmatpush1.msra.mxu0 0.0
    %898 = vmatprep.subr.mxu0 0.0
    %899 = vmatpush1.msra.mxu0 0.0
    %900 = vmatprep.subr.mxu0 0.0
    %901 = vmatpush1.msra.mxu0 0.0
    %902 = vmatprep.subr.mxu0 0.0
    %903 = vmatpush1.msra.mxu0 0.0
    %904 = vmatprep.subr.mxu0 0.0
    %905 = vmatpush1.msra.mxu0 0.0
    %906 = vmatprep.subr.mxu0 0.0
    %907 = vmatpush1.msra.mxu0 0.0
    %908 = vmatprep.subr.mxu0 0.0
    %909 = vmatpush1.msra.mxu0 0.0
    %910 = vmatprep.subr.mxu0 0.0
    %911 = vmatpush1.msra.mxu0 0.0
    %912 = vmatprep.subr.mxu0 0.0
    %913 = vmatpush1.msra.mxu0 0.0
    %914 = vmatprep.subr.mxu0 0.0
    %915 = vmatpush1.msra.mxu0 0.0
    %916 = vmatprep.subr.mxu0 0.0
    %917 = vmatpush1.msra.mxu0 0.0
    %918 = vmatprep.subr.mxu0 0.0
    %919 = vmatpush1.msra.mxu0 0.0
    %920 = vmatprep.subr.mxu0 0.0
    %921 = vmatpush1.msra.mxu0 0.0
    %922 = vmatprep.subr.mxu0 0.0
    %923 = vmatpush1.msra.mxu0 0.0
    %924 = vmatprep.subr.mxu0 0.0
    %925 = vmatpush1.msra.mxu0 0.0
    %926 = vmatprep.subr.mxu0 0.0
    %927 = vmatpush1.msra.mxu0 0.0
    %928 = vmatprep.subr.mxu0 0.0
    %929 = vmatpush1.msra.mxu0 0.0
    %930 = vmatprep.subr.mxu0 0.0
    %931 = vmatpush1.msra.mxu0 0.0
    %932 = vmatprep.subr.mxu0 0.0
    %933 = vmatpush1.msra.mxu0 0.0
    %934 = vmatprep.subr.mxu0 0.0
    %935 = vmatpush1.msra.mxu0 0.0
    %936 = vmatprep.subr.mxu0 0.0
    %937 = vmatpush1.msra.mxu0 0.0
    %938 = vmatprep.subr.mxu0 0.0
    %939 = vmatpush1.msra.mxu0 0.0
    %940 = vmatprep.subr.mxu0 0.0
    %941 = vmatpush1.msra.mxu0 0.0
    %942 = vmatprep.subr.mxu0 0.0
    %943 = vmatpush1.msra.mxu0 0.0
    %944 = vmatprep.subr.mxu0 0.0
    %945 = vmatpush1.msra.mxu0 0.0
    %946 = vmatprep.subr.mxu0 0.0
    %947 = vmatpush1.msra.mxu0 0.0
    %948 = vmatprep.subr.mxu0 0.0
    %949 = vmatpush1.msra.mxu0 0.0
    %950 = vmatprep.mubr.f32.mxu0 0.0
    %951 = vmatmul.mubr.f32.gmra.mrb[0].mxu0 %v744
    %v952 = vpop.f32.mrb[0].mxu0
    %v953 = vadd.f32 1e-05, %v952
    %v954 = vpop.f32.mrb[0].mxu0
    %955 = vdwg.mxu0
    %956 = vmatprep.subr.mxu0 0.0
    %957 = vmatpush1.msra.mxu0 %v411
    %958 = vmatprep.subr.mxu0 0.0
    %959 = vmatpush1.msra.mxu0 %v416
    %960 = vmatprep.subr.mxu0 0.0
    %961 = vmatpush1.msra.mxu0 0.0
    %962 = vmatprep.subr.mxu0 0.0
    %963 = vmatpush1.msra.mxu0 0.0
    %964 = vmatprep.subr.mxu0 0.0
    %965 = vmatpush1.msra.mxu0 0.0
    %966 = vmatprep.subr.mxu0 0.0
    %967 = vmatpush1.msra.mxu0 0.0
    %968 = vmatprep.subr.mxu0 0.0
    %969 = vmatpush1.msra.mxu0 0.0
    %970 = vmatprep.subr.mxu0 0.0
    %971 = vmatpush1.msra.mxu0 0.0
    %972 = vmatprep.subr.mxu0 0.0
    %973 = vmatpush1.msra.mxu0 0.0
    %974 = vmatprep.subr.mxu0 0.0
    %975 = vmatpush1.msra.mxu0 0.0
    %976 = vmatprep.subr.mxu0 0.0
    %977 = vmatpush1.msra.mxu0 0.0
    %978 = vmatprep.subr.mxu0 0.0
    %979 = vmatpush1.msra.mxu0 0.0
    %980 = vmatprep.subr.mxu0 0.0
    %981 = vmatpush1.msra.mxu0 0.0
    %982 = vmatprep.subr.mxu0 0.0
    %983 = vmatpush1.msra.mxu0 0.0
    %984 = vmatprep.subr.mxu0 0.0
    %985 = vmatpush1.msra.mxu0 0.0
    %986 = vmatprep.subr.mxu0 0.0
    %987 = vmatpush1.msra.mxu0 0.0
    %988 = vmatprep.subr.mxu0 0.0
    %989 = vmatpush1.msra.mxu0 0.0
    %990 = vmatprep.subr.mxu0 0.0
    %991 = vmatpush1.msra.mxu0 0.0
    %992 = vmatprep.subr.mxu0 0.0
    %993 = vmatpush1.msra.mxu0 0.0
    %994 = vmatprep.subr.mxu0 0.0
    %995 = vmatpush1.msra.mxu0 0.0
    %996 = vmatprep.subr.mxu0 0.0
    %997 = vmatpush1.msra.mxu0 0.0
    %998 = vmatprep.subr.mxu0 0.0
    %999 = vmatpush1.msra.mxu0 0.0
    %1000 = vmatprep.subr.mxu0 0.0
    %1001 = vmatpush1.msra.mxu0 0.0
    %1002 = vmatprep.subr.mxu0 0.0
    %1003 = vmatpush1.msra.mxu0 0.0
    %1004 = vmatprep.subr.mxu0 0.0
    %1005 = vmatpush1.msra.mxu0 0.0
    %1006 = vmatprep.subr.mxu0 0.0
    %1007 = vmatpush1.msra.mxu0 0.0
    %1008 = vmatprep.subr.mxu0 0.0
    %1009 = vmatpush1.msra.mxu0 0.0
    %1010 = vmatprep.subr.mxu0 0.0
    %1011 = vmatpush1.msra.mxu0 0.0
    %1012 = vmatprep.subr.mxu0 0.0
    %1013 = vmatpush1.msra.mxu0 0.0
    %1014 = vmatprep.subr.mxu0 0.0
    %1015 = vmatpush1.msra.mxu0 0.0
    %1016 = vmatprep.subr.mxu0 0.0
    %1017 = vmatpush1.msra.mxu0 0.0
    %1018 = vmatprep.subr.mxu0 0.0
    %1019 = vmatpush1.msra.mxu0 0.0
    %1020 = vmatprep.mubr.f32.mxu0 0.0
    %1021 = vmatmul.mubr.f32.gmra.mrb[0].mxu0 %v744
    %v1022 = vpop.f32.mrb[0].mxu0
    %v1023 = vadd.f32 1e-05, %v1022
    %v1024 = vpop.f32.mrb[0].mxu0
    %1025 = vdwg.mxu0
    %1026 = vmatprep.subr.mxu0 0.0
    %1027 = vmatpush1.msra.mxu0 %v492
    %1028 = vmatprep.subr.mxu0 0.0
    %1029 = vmatpush1.msra.mxu0 %v497
    %1030 = vmatprep.subr.mxu0 0.0
    %1031 = vmatpush1.msra.mxu0 0.0
    %1032 = vmatprep.subr.mxu0 0.0
    %1033 = vmatpush1.msra.mxu0 0.0
    %1034 = vmatprep.subr.mxu0 0.0
    %1035 = vmatpush1.msra.mxu0 0.0
    %1036 = vmatprep.subr.mxu0 0.0
    %1037 = vmatpush1.msra.mxu0 0.0
    %1038 = vmatprep.subr.mxu0 0.0
    %1039 = vmatpush1.msra.mxu0 0.0
    %1040 = vmatprep.subr.mxu0 0.0
    %1041 = vmatpush1.msra.mxu0 0.0
    %1042 = vmatprep.subr.mxu0 0.0
    %1043 = vmatpush1.msra.mxu0 0.0
    %1044 = vmatprep.subr.mxu0 0.0
    %1045 = vmatpush1.msra.mxu0 0.0
    %1046 = vmatprep.subr.mxu0 0.0
    %1047 = vmatpush1.msra.mxu0 0.0
    %1048 = vmatprep.subr.mxu0 0.0
    %1049 = vmatpush1.msra.mxu0 0.0
    %1050 = vmatprep.subr.mxu0 0.0
    %1051 = vmatpush1.msra.mxu0 0.0
    %1052 = vmatprep.subr.mxu0 0.0
    %1053 = vmatpush1.msra.mxu0 0.0
    %1054 = vmatprep.subr.mxu0 0.0
    %1055 = vmatpush1.msra.mxu0 0.0
    %1056 = vmatprep.subr.mxu0 0.0
    %1057 = vmatpush1.msra.mxu0 0.0
    %1058 = vmatprep.subr.mxu0 0.0
    %1059 = vmatpush1.msra.mxu0 0.0
    %1060 = vmatprep.subr.mxu0 0.0
    %1061 = vmatpush1.msra.mxu0 0.0
    %1062 = vmatprep.subr.mxu0 0.0
    %1063 = vmatpush1.msra.mxu0 0.0
    %1064 = vmatprep.subr.mxu0 0.0
    %1065 = vmatpush1.msra.mxu0 0.0
    %1066 = vmatprep.subr.mxu0 0.0
    %1067 = vmatpush1.msra.mxu0 0.0
    %1068 = vmatprep.subr.mxu0 0.0
    %1069 = vmatpush1.msra.mxu0 0.0
    %1070 = vmatprep.subr.mxu0 0.0
    %1071 = vmatpush1.msra.mxu0 0.0
    %1072 = vmatprep.subr.mxu0 0.0
    %1073 = vmatpush1.msra.mxu0 0.0
    %1074 = vmatprep.subr.mxu0 0.0
    %1075 = vmatpush1.msra.mxu0 0.0
    %1076 = vmatprep.subr.mxu0 0.0
    %1077 = vmatpush1.msra.mxu0 0.0
    %1078 = vmatprep.subr.mxu0 0.0
    %1079 = vmatpush1.msra.mxu0 0.0
    %1080 = vmatprep.subr.mxu0 0.0
    %1081 = vmatpush1.msra.mxu0 0.0
    %1082 = vmatprep.subr.mxu0 0.0
    %1083 = vmatpush1.msra.mxu0 0.0
    %1084 = vmatprep.subr.mxu0 0.0
    %1085 = vmatpush1.msra.mxu0 0.0
    %1086 = vmatprep.subr.mxu0 0.0
    %1087 = vmatpush1.msra.mxu0 0.0
    %1088 = vmatprep.subr.mxu0 0.0
    %1089 = vmatpush1.msra.mxu0 0.0
    %1090 = vmatprep.mubr.f32.mxu0 0.0
    %1091 = vmatmul.mubr.f32.gmra.mrb[0].mxu0 %v744
    %v1092 = vpop.f32.mrb[0].mxu0
    %v1093 = vadd.f32 1e-05, %v1092
    %v1094 = vpop.f32.mrb[0].mxu0
    %1095 = vdwg.mxu0
    %1096 = vmatprep.subr.mxu0 0.0
    %1097 = vmatpush1.msra.mxu0 %v573
    %1098 = vmatprep.subr.mxu0 0.0
    %1099 = vmatpush1.msra.mxu0 %v578
    %1100 = vmatprep.subr.mxu0 0.0
    %1101 = vmatpush1.msra.mxu0 0.0
    %1102 = vmatprep.subr.mxu0 0.0
    %1103 = vmatpush1.msra.mxu0 0.0
    %1104 = vmatprep.subr.mxu0 0.0
    %1105 = vmatpush1.msra.mxu0 0.0
    %1106 = vmatprep.subr.mxu0 0.0
    %1107 = vmatpush1.msra.mxu0 0.0
    %1108 = vmatprep.subr.mxu0 0.0
    %1109 = vmatpush1.msra.mxu0 0.0
    %1110 = vmatprep.subr.mxu0 0.0
    %1111 = vmatpush1.msra.mxu0 0.0
    %1112 = vmatprep.subr.mxu0 0.0
    %1113 = vmatpush1.msra.mxu0 0.0
    %1114 = vmatprep.subr.mxu0 0.0
    %1115 = vmatpush1.msra.mxu0 0.0
    %1116 = vmatprep.subr.mxu0 0.0
    %1117 = vmatpush1.msra.mxu0 0.0
    %1118 = vmatprep.subr.mxu0 0.0
    %1119 = vmatpush1.msra.mxu0 0.0
    %1120 = vmatprep.subr.mxu0 0.0
    %1121 = vmatpush1.msra.mxu0 0.0
    %1122 = vmatprep.subr.mxu0 0.0
    %1123 = vmatpush1.msra.mxu0 0.0
    %1124 = vmatprep.subr.mxu0 0.0
    %1125 = vmatpush1.msra.mxu0 0.0
    %1126 = vmatprep.subr.mxu0 0.0
    %1127 = vmatpush1.msra.mxu0 0.0
    %1128 = vmatprep.subr.mxu0 0.0
    %1129 = vmatpush1.msra.mxu0 0.0
    %1130 = vmatprep.subr.mxu0 0.0
    %1131 = vmatpush1.msra.mxu0 0.0
    %1132 = vmatprep.subr.mxu0 0.0
    %1133 = vmatpush1.msra.mxu0 0.0
    %1134 = vmatprep.subr.mxu0 0.0
    %1135 = vmatpush1.msra.mxu0 0.0
    %1136 = vmatprep.subr.mxu0 0.0
    %1137 = vmatpush1.msra.mxu0 0.0
    %1138 = vmatprep.subr.mxu0 0.0
    %1139 = vmatpush1.msra.mxu0 0.0
    %1140 = vmatprep.subr.mxu0 0.0
    %1141 = vmatpush1.msra.mxu0 0.0
    %1142 = vmatprep.subr.mxu0 0.0
    %1143 = vmatpush1.msra.mxu0 0.0
    %1144 = vmatprep.subr.mxu0 0.0
    %1145 = vmatpush1.msra.mxu0 0.0
    %1146 = vmatprep.subr.mxu0 0.0
    %1147 = vmatpush1.msra.mxu0 0.0
    %1148 = vmatprep.subr.mxu0 0.0
    %1149 = vmatpush1.msra.mxu0 0.0
    %1150 = vmatprep.subr.mxu0 0.0
    %1151 = vmatpush1.msra.mxu0 0.0
    %1152 = vmatprep.subr.mxu0 0.0
    %1153 = vmatpush1.msra.mxu0 0.0
    %1154 = vmatprep.subr.mxu0 0.0
    %1155 = vmatpush1.msra.mxu0 0.0
    %1156 = vmatprep.subr.mxu0 0.0
    %1157 = vmatpush1.msra.mxu0 0.0
    %1158 = vmatprep.subr.mxu0 0.0
    %1159 = vmatpush1.msra.mxu0 0.0
    %1160 = vmatprep.mubr.f32.mxu0 0.0
    %1161 = vmatmul.mubr.f32.gmra.mrb[0].mxu0 %v744
    %v1162 = vpop.f32.mrb[0].mxu0
    %v1163 = vadd.f32 1e-05, %v1162
    %v1164 = vpop.f32.mrb[0].mxu0
    %1165 = vdwg.mxu0
    %1166 = vmatprep.subr.mxu0 0.0
    %1167 = vmatpush1.msra.mxu0 %v654
    %1168 = vmatprep.subr.mxu0 0.0
    %1169 = vmatpush1.msra.mxu0 %v659
    %1170 = vmatprep.subr.mxu0 0.0
    %1171 = vmatpush1.msra.mxu0 0.0
    %1172 = vmatprep.subr.mxu0 0.0
    %1173 = vmatpush1.msra.mxu0 0.0
    %1174 = vmatprep.subr.mxu0 0.0
    %1175 = vmatpush1.msra.mxu0 0.0
    %1176 = vmatprep.subr.mxu0 0.0
    %1177 = vmatpush1.msra.mxu0 0.0
    %1178 = vmatprep.subr.mxu0 0.0
    %1179 = vmatpush1.msra.mxu0 0.0
    %1180 = vmatprep.subr.mxu0 0.0
    %1181 = vmatpush1.msra.mxu0 0.0
    %1182 = vmatprep.subr.mxu0 0.0
    %1183 = vmatpush1.msra.mxu0 0.0
    %1184 = vmatprep.subr.mxu0 0.0
    %1185 = vmatpush1.msra.mxu0 0.0
    %1186 = vmatprep.subr.mxu0 0.0
    %1187 = vmatpush1.msra.mxu0 0.0
    %1188 = vmatprep.subr.mxu0 0.0
    %1189 = vmatpush1.msra.mxu0 0.0
    %1190 = vmatprep.subr.mxu0 0.0
    %1191 = vmatpush1.msra.mxu0 0.0
    %1192 = vmatprep.subr.mxu0 0.0
    %1193 = vmatpush1.msra.mxu0 0.0
    %1194 = vmatprep.subr.mxu0 0.0
    %1195 = vmatpush1.msra.mxu0 0.0
    %1196 = vmatprep.subr.mxu0 0.0
    %1197 = vmatpush1.msra.mxu0 0.0
    %1198 = vmatprep.subr.mxu0 0.0
    %1199 = vmatpush1.msra.mxu0 0.0
    %1200 = vmatprep.subr.mxu0 0.0
    %1201 = vmatpush1.msra.mxu0 0.0
    %1202 = vmatprep.subr.mxu0 0.0
    %1203 = vmatpush1.msra.mxu0 0.0
    %1204 = vmatprep.subr.mxu0 0.0
    %1205 = vmatpush1.msra.mxu0 0.0
    %1206 = vmatprep.subr.mxu0 0.0
    %1207 = vmatpush1.msra.mxu0 0.0
    %1208 = vmatprep.subr.mxu0 0.0
    %1209 = vmatpush1.msra.mxu0 0.0
    %1210 = vmatprep.subr.mxu0 0.0
    %1211 = vmatpush1.msra.mxu0 0.0
    %1212 = vmatprep.subr.mxu0 0.0
    %1213 = vmatpush1.msra.mxu0 0.0
    %1214 = vmatprep.subr.mxu0 0.0
    %1215 = vmatpush1.msra.mxu0 0.0
    %1216 = vmatprep.subr.mxu0 0.0
    %1217 = vmatpush1.msra.mxu0 0.0
    %1218 = vmatprep.subr.mxu0 0.0
    %1219 = vmatpush1.msra.mxu0 0.0
    %1220 = vmatprep.subr.mxu0 0.0
    %1221 = vmatpush1.msra.mxu0 0.0
    %1222 = vmatprep.subr.mxu0 0.0
    %1223 = vmatpush1.msra.mxu0 0.0
    %1224 = vmatprep.subr.mxu0 0.0
    %1225 = vmatpush1.msra.mxu0 0.0
    %1226 = vmatprep.subr.mxu0 0.0
    %1227 = vmatpush1.msra.mxu0 0.0
    %1228 = vmatprep.subr.mxu0 0.0
    %1229 = vmatpush1.msra.mxu0 0.0
    %1230 = vmatprep.mubr.f32.mxu0 0.0
    %1231 = vmatmul.mubr.f32.gmra.mrb[0].mxu0 %v744
    %v1232 = vpop.f32.mrb[0].mxu0
    %v1233 = vadd.f32 1e-05, %v1232
    %v1234 = vpop.f32.mrb[0].mxu0
    %1235 = vdwg.mxu0
    %1236 = vmatprep.subr.mxu0 0.0
    %1237 = vmatpush1.msra.mxu0 %v735
    %1238 = vmatprep.subr.mxu0 0.0
    %1239 = vmatpush1.msra.mxu0 %v740
    %1240 = vmatprep.subr.mxu0 0.0
    %1241 = vmatpush1.msra.mxu0 0.0
    %1242 = vmatprep.subr.mxu0 0.0
    %1243 = vmatpush1.msra.mxu0 0.0
    %1244 = vmatprep.subr.mxu0 0.0
    %1245 = vmatpush1.msra.mxu0 0.0
    %1246 = vmatprep.subr.mxu0 0.0
    %1247 = vmatpush1.msra.mxu0 0.0
    %1248 = vmatprep.subr.mxu0 0.0
    %1249 = vmatpush1.msra.mxu0 0.0
    %1250 = vmatprep.subr.mxu0 0.0
    %1251 = vmatpush1.msra.mxu0 0.0
    %1252 = vmatprep.subr.mxu0 0.0
    %1253 = vmatpush1.msra.mxu0 0.0
    %1254 = vmatprep.subr.mxu0 0.0
    %1255 = vmatpush1.msra.mxu0 0.0
    %1256 = vmatprep.subr.mxu0 0.0
    %1257 = vmatpush1.msra.mxu0 0.0
    %1258 = vmatprep.subr.mxu0 0.0
    %1259 = vmatpush1.msra.mxu0 0.0
    %1260 = vmatprep.subr.mxu0 0.0
    %1261 = vmatpush1.msra.mxu0 0.0
    %1262 = vmatprep.subr.mxu0 0.0
    %1263 = vmatpush1.msra.mxu0 0.0
    %1264 = vmatprep.subr.mxu0 0.0
    %1265 = vmatpush1.msra.mxu0 0.0
    %1266 = vmatprep.subr.mxu0 0.0
    %1267 = vmatpush1.msra.mxu0 0.0
    %1268 = vmatprep.subr.mxu0 0.0
    %1269 = vmatpush1.msra.mxu0 0.0
    %1270 = vmatprep.subr.mxu0 0.0
    %1271 = vmatpush1.msra.mxu0 0.0
    %1272 = vmatprep.subr.mxu0 0.0
    %1273 = vmatpush1.msra.mxu0 0.0
    %1274 = vmatprep.subr.mxu0 0.0
    %1275 = vmatpush1.msra.mxu0 0.0
    %1276 = vmatprep.subr.mxu0 0.0
    %1277 = vmatpush1.msra.mxu0 0.0
    %1278 = vmatprep.subr.mxu0 0.0
    %1279 = vmatpush1.msra.mxu0 0.0
    %1280 = vmatprep.subr.mxu0 0.0
    %1281 = vmatpush1.msra.mxu0 0.0
    %1282 = vmatprep.subr.mxu0 0.0
    %1283 = vmatpush1.msra.mxu0 0.0
    %1284 = vmatprep.subr.mxu0 0.0
    %1285 = vmatpush1.msra.mxu0 0.0
    %1286 = vmatprep.subr.mxu0 0.0
    %1287 = vmatpush1.msra.mxu0 0.0
    %1288 = vmatprep.subr.mxu0 0.0
    %1289 = vmatpush1.msra.mxu0 0.0
    %1290 = vmatprep.subr.mxu0 0.0
    %1291 = vmatpush1.msra.mxu0 0.0
    %1292 = vmatprep.subr.mxu0 0.0
    %1293 = vmatpush1.msra.mxu0 0.0
    %1294 = vmatprep.subr.mxu0 0.0
    %1295 = vmatpush1.msra.mxu0 0.0
    %1296 = vmatprep.subr.mxu0 0.0
    %1297 = vmatpush1.msra.mxu0 0.0
    %1298 = vmatprep.subr.mxu0 0.0
    %1299 = vmatpush1.msra.mxu0 0.0
    %1300 = vmatprep.mubr.f32.mxu0 0.0
    %1301 = vmatmul.mubr.f32.gmra.mrb[0].mxu0 %v744
    %v1302 = vpop.f32.mrb[0].mxu0
    %v1303 = vadd.f32 1e-05, %v1302
    %v1304 = vpop.f32.mrb[0].mxu0
    %1305 = vdwg.mxu0
    %v1306 = vrcp.pop %v813
    %v1307 = vmul.f32 %v77, %v1306
    %v1308 = vrcp.pop %v883
    %v1309 = vmul.f32 %v78, %v1308
    %v1310 = vrcp.pop %v953
    %v1311 = vmul.f32 %v79, %v1310
    %v1312 = vrcp.pop %v1023
    %v1313 = vmul.f32 %v80, %v1312
    %v1314 = vrcp.pop %v1093
    %v1315 = vmul.f32 %v81, %v1314
    %v1316 = vrcp.pop %v1163
    %v1317 = vmul.f32 %v82, %v1316
    %v1318 = vrcp.pop %v1233
    %v1319 = vmul.f32 %v83, %v1318
    %v1320 = vrcp.pop %v1303
    %v1321 = vmul.f32 %v84, %v1320
    %vm1322 = vcmask 64512
    %v1324 = vsel %vm1322, %v86, 0
    %v1327 = vsel %vm1322, %v87, 0
    %1329 = vmatprep.subr.mxu0 0.0
    %1330 = vmatpush1.msra.mxu0 %v1307
    %1331 = vmatprep.subr.mxu0 0.0
    %1332 = vmatpush1.msra.mxu0 0.0
    %1333 = vmatprep.subr.mxu0 0.0
    %1334 = vmatpush1.msra.mxu0 0.0
    %1335 = vmatprep.subr.mxu0 0.0
    %1336 = vmatpush1.msra.mxu0 0.0
    %1337 = vmatprep.subr.mxu0 0.0
    %1338 = vmatpush1.msra.mxu0 0.0
    %1339 = vmatprep.subr.mxu0 0.0
    %1340 = vmatpush1.msra.mxu0 0.0
    %1341 = vmatprep.subr.mxu0 0.0
    %1342 = vmatpush1.msra.mxu0 0.0
    %1343 = vmatprep.subr.mxu0 0.0
    %1344 = vmatpush1.msra.mxu0 0.0
    %1345 = vmatprep.subr.mxu0 0.0
    %1346 = vmatpush1.msra.mxu0 0.0
    %1347 = vmatprep.subr.mxu0 0.0
    %1348 = vmatpush1.msra.mxu0 0.0
    %1349 = vmatprep.subr.mxu0 0.0
    %1350 = vmatpush1.msra.mxu0 0.0
    %1351 = vmatprep.subr.mxu0 0.0
    %1352 = vmatpush1.msra.mxu0 0.0
    %1353 = vmatprep.subr.mxu0 0.0
    %1354 = vmatpush1.msra.mxu0 0.0
    %1355 = vmatprep.subr.mxu0 0.0
    %1356 = vmatpush1.msra.mxu0 0.0
    %1357 = vmatprep.subr.mxu0 0.0
    %1358 = vmatpush1.msra.mxu0 0.0
    %1359 = vmatprep.subr.mxu0 0.0
    %1360 = vmatpush1.msra.mxu0 0.0
    %1361 = vmatprep.subr.mxu0 0.0
    %1362 = vmatpush1.msra.mxu0 0.0
    %1363 = vmatprep.subr.mxu0 0.0
    %1364 = vmatpush1.msra.mxu0 0.0
    %1365 = vmatprep.subr.mxu0 0.0
    %1366 = vmatpush1.msra.mxu0 0.0
    %1367 = vmatprep.subr.mxu0 0.0
    %1368 = vmatpush1.msra.mxu0 0.0
    %1369 = vmatprep.subr.mxu0 0.0
    %1370 = vmatpush1.msra.mxu0 0.0
    %1371 = vmatprep.subr.mxu0 0.0
    %1372 = vmatpush1.msra.mxu0 0.0
    %1373 = vmatprep.subr.mxu0 0.0
    %1374 = vmatpush1.msra.mxu0 0.0
    %1375 = vmatprep.subr.mxu0 0.0
    %1376 = vmatpush1.msra.mxu0 0.0
    %1377 = vmatprep.subr.mxu0 0.0
    %1378 = vmatpush1.msra.mxu0 0.0
    %1379 = vmatprep.subr.mxu0 0.0
    %1380 = vmatpush1.msra.mxu0 0.0
    %1381 = vmatprep.subr.mxu0 0.0
    %1382 = vmatpush1.msra.mxu0 0.0
    %1383 = vmatprep.subr.mxu0 0.0
    %1384 = vmatpush1.msra.mxu0 0.0
    %1385 = vmatprep.subr.mxu0 0.0
    %1386 = vmatpush1.msra.mxu0 0.0
    %1387 = vmatprep.subr.mxu0 0.0
    %1388 = vmatpush1.msra.mxu0 0.0
    %1389 = vmatprep.subr.mxu0 0.0
    %1390 = vmatpush1.msra.mxu0 0.0
    %1391 = vmatprep.subr.mxu0 0.0
    %1392 = vmatpush1.msra.mxu0 0.0
    %1393 = vmatprep.mubr.f32.mxu0 0.0
    %1394 = vmatmul.mubr.f32.gmra.mrb[0].mxu0 %v1324
    %v1395 = vpop.f32.mrb[0].mxu0
    %v1396 = vadd.f32 0.0, %v1395
    %v1397 = vpop.f32.mrb[0].mxu0
    %1398 = vmatprep.mubr.f32.mxu0 0.0
    %1399 = vmatmul.mubr.f32.gmra.mrb[0].mxu0 %v1327
    %v1400 = vpop.f32.mrb[0].mxu0
    %v1401 = vadd.f32 0.0, %v1400
    %v1402 = vpop.f32.mrb[0].mxu0
    %1403 = vdwg.mxu0
    %1404 = vmatprep.subr.mxu0 0.0
    %1405 = vmatpush1.msra.mxu0 %v1309
    %1406 = vmatprep.subr.mxu0 0.0
    %1407 = vmatpush1.msra.mxu0 0.0
    %1408 = vmatprep.subr.mxu0 0.0
    %1409 = vmatpush1.msra.mxu0 0.0
    %1410 = vmatprep.subr.mxu0 0.0
    %1411 = vmatpush1.msra.mxu0 0.0
    %1412 = vmatprep.subr.mxu0 0.0
    %1413 = vmatpush1.msra.mxu0 0.0
    %1414 = vmatprep.subr.mxu0 0.0
    %1415 = vmatpush1.msra.mxu0 0.0
    %1416 = vmatprep.subr.mxu0 0.0
    %1417 = vmatpush1.msra.mxu0 0.0
    %1418 = vmatprep.subr.mxu0 0.0
    %1419 = vmatpush1.msra.mxu0 0.0
    %1420 = vmatprep.subr.mxu0 0.0
    %1421 = vmatpush1.msra.mxu0 0.0
    %1422 = vmatprep.subr.mxu0 0.0
    %1423 = vmatpush1.msra.mxu0 0.0
    %1424 = vmatprep.subr.mxu0 0.0
    %1425 = vmatpush1.msra.mxu0 0.0
    %1426 = vmatprep.subr.mxu0 0.0
    %1427 = vmatpush1.msra.mxu0 0.0
    %1428 = vmatprep.subr.mxu0 0.0
    %1429 = vmatpush1.msra.mxu0 0.0
    %1430 = vmatprep.subr.mxu0 0.0
    %1431 = vmatpush1.msra.mxu0 0.0
    %1432 = vmatprep.subr.mxu0 0.0
    %1433 = vmatpush1.msra.mxu0 0.0
    %1434 = vmatprep.subr.mxu0 0.0
    %1435 = vmatpush1.msra.mxu0 0.0
    %1436 = vmatprep.subr.mxu0 0.0
    %1437 = vmatpush1.msra.mxu0 0.0
    %1438 = vmatprep.subr.mxu0 0.0
    %1439 = vmatpush1.msra.mxu0 0.0
    %1440 = vmatprep.subr.mxu0 0.0
    %1441 = vmatpush1.msra.mxu0 0.0
    %1442 = vmatprep.subr.mxu0 0.0
    %1443 = vmatpush1.msra.mxu0 0.0
    %1444 = vmatprep.subr.mxu0 0.0
    %1445 = vmatpush1.msra.mxu0 0.0
    %1446 = vmatprep.subr.mxu0 0.0
    %1447 = vmatpush1.msra.mxu0 0.0
    %1448 = vmatprep.subr.mxu0 0.0
    %1449 = vmatpush1.msra.mxu0 0.0
    %1450 = vmatprep.subr.mxu0 0.0
    %1451 = vmatpush1.msra.mxu0 0.0
    %1452 = vmatprep.subr.mxu0 0.0
    %1453 = vmatpush1.msra.mxu0 0.0
    %1454 = vmatprep.subr.mxu0 0.0
    %1455 = vmatpush1.msra.mxu0 0.0
    %1456 = vmatprep.subr.mxu0 0.0
    %1457 = vmatpush1.msra.mxu0 0.0
    %1458 = vmatprep.subr.mxu0 0.0
    %1459 = vmatpush1.msra.mxu0 0.0
    %1460 = vmatprep.subr.mxu0 0.0
    %1461 = vmatpush1.msra.mxu0 0.0
    %1462 = vmatprep.subr.mxu0 0.0
    %1463 = vmatpush1.msra.mxu0 0.0
    %1464 = vmatprep.subr.mxu0 0.0
    %1465 = vmatpush1.msra.mxu0 0.0
    %1466 = vmatprep.subr.mxu0 0.0
    %1467 = vmatpush1.msra.mxu0 0.0
    %1468 = vmatprep.mubr.f32.mxu0 0.0
    %1469 = vmatmul.mubr.f32.gmra.mrb[0].mxu0 %v1324
    %v1470 = vpop.f32.mrb[0].mxu0
    %v1471 = vadd.f32 0.0, %v1470
    %v1472 = vpop.f32.mrb[0].mxu0
    %1473 = vmatprep.mubr.f32.mxu0 0.0
    %1474 = vmatmul.mubr.f32.gmra.mrb[0].mxu0 %v1327
    %v1475 = vpop.f32.mrb[0].mxu0
    %v1476 = vadd.f32 0.0, %v1475
    %v1477 = vpop.f32.mrb[0].mxu0
    %1478 = vdwg.mxu0
    %1479 = vmatprep.subr.mxu0 0.0
    %1480 = vmatpush1.msra.mxu0 %v1311
    %1481 = vmatprep.subr.mxu0 0.0
    %1482 = vmatpush1.msra.mxu0 0.0
    %1483 = vmatprep.subr.mxu0 0.0
    %1484 = vmatpush1.msra.mxu0 0.0
    %1485 = vmatprep.subr.mxu0 0.0
    %1486 = vmatpush1.msra.mxu0 0.0
    %1487 = vmatprep.subr.mxu0 0.0
    %1488 = vmatpush1.msra.mxu0 0.0
    %1489 = vmatprep.subr.mxu0 0.0
    %1490 = vmatpush1.msra.mxu0 0.0
    %1491 = vmatprep.subr.mxu0 0.0
    %1492 = vmatpush1.msra.mxu0 0.0
    %1493 = vmatprep.subr.mxu0 0.0
    %1494 = vmatpush1.msra.mxu0 0.0
    %1495 = vmatprep.subr.mxu0 0.0
    %1496 = vmatpush1.msra.mxu0 0.0
    %1497 = vmatprep.subr.mxu0 0.0
    %1498 = vmatpush1.msra.mxu0 0.0
    %1499 = vmatprep.subr.mxu0 0.0
    %1500 = vmatpush1.msra.mxu0 0.0
    %1501 = vmatprep.subr.mxu0 0.0
    %1502 = vmatpush1.msra.mxu0 0.0
    %1503 = vmatprep.subr.mxu0 0.0
    %1504 = vmatpush1.msra.mxu0 0.0
    %1505 = vmatprep.subr.mxu0 0.0
    %1506 = vmatpush1.msra.mxu0 0.0
    %1507 = vmatprep.subr.mxu0 0.0
    %1508 = vmatpush1.msra.mxu0 0.0
    %1509 = vmatprep.subr.mxu0 0.0
    %1510 = vmatpush1.msra.mxu0 0.0
    %1511 = vmatprep.subr.mxu0 0.0
    %1512 = vmatpush1.msra.mxu0 0.0
    %1513 = vmatprep.subr.mxu0 0.0
    %1514 = vmatpush1.msra.mxu0 0.0
    %1515 = vmatprep.subr.mxu0 0.0
    %1516 = vmatpush1.msra.mxu0 0.0
    %1517 = vmatprep.subr.mxu0 0.0
    %1518 = vmatpush1.msra.mxu0 0.0
    %1519 = vmatprep.subr.mxu0 0.0
    %1520 = vmatpush1.msra.mxu0 0.0
    %1521 = vmatprep.subr.mxu0 0.0
    %1522 = vmatpush1.msra.mxu0 0.0
    %1523 = vmatprep.subr.mxu0 0.0
    %1524 = vmatpush1.msra.mxu0 0.0
    %1525 = vmatprep.subr.mxu0 0.0
    %1526 = vmatpush1.msra.mxu0 0.0
    %1527 = vmatprep.subr.mxu0 0.0
    %1528 = vmatpush1.msra.mxu0 0.0
    %1529 = vmatprep.subr.mxu0 0.0
    %1530 = vmatpush1.msra.mxu0 0.0
    %1531 = vmatprep.subr.mxu0 0.0
    %1532 = vmatpush1.msra.mxu0 0.0
    %1533 = vmatprep.subr.mxu0 0.0
    %1534 = vmatpush1.msra.mxu0 0.0
    %1535 = vmatprep.subr.mxu0 0.0
    %1536 = vmatpush1.msra.mxu0 0.0
    %1537 = vmatprep.subr.mxu0 0.0
    %1538 = vmatpush1.msra.mxu0 0.0
    %1539 = vmatprep.subr.mxu0 0.0
    %1540 = vmatpush1.msra.mxu0 0.0
    %1541 = vmatprep.subr.mxu0 0.0
    %1542 = vmatpush1.msra.mxu0 0.0
    %1543 = vmatprep.mubr.f32.mxu0 0.0
    %1544 = vmatmul.mubr.f32.gmra.mrb[0].mxu0 %v1324
    %v1545 = vpop.f32.mrb[0].mxu0
    %v1546 = vadd.f32 0.0, %v1545
    %v1547 = vpop.f32.mrb[0].mxu0
    %1548 = vmatprep.mubr.f32.mxu0 0.0
    %1549 = vmatmul.mubr.f32.gmra.mrb[0].mxu0 %v1327
    %v1550 = vpop.f32.mrb[0].mxu0
    %v1551 = vadd.f32 0.0, %v1550
    %v1552 = vpop.f32.mrb[0].mxu0
    %1553 = vdwg.mxu0
    %1554 = vmatprep.subr.mxu0 0.0
    %1555 = vmatpush1.msra.mxu0 %v1313
    %1556 = vmatprep.subr.mxu0 0.0
    %1557 = vmatpush1.msra.mxu0 0.0
    %1558 = vmatprep.subr.mxu0 0.0
    %1559 = vmatpush1.msra.mxu0 0.0
    %1560 = vmatprep.subr.mxu0 0.0
    %1561 = vmatpush1.msra.mxu0 0.0
    %1562 = vmatprep.subr.mxu0 0.0
    %1563 = vmatpush1.msra.mxu0 0.0
    %1564 = vmatprep.subr.mxu0 0.0
    %1565 = vmatpush1.msra.mxu0 0.0
    %1566 = vmatprep.subr.mxu0 0.0
    %1567 = vmatpush1.msra.mxu0 0.0
    %1568 = vmatprep.subr.mxu0 0.0
    %1569 = vmatpush1.msra.mxu0 0.0
    %1570 = vmatprep.subr.mxu0 0.0
    %1571 = vmatpush1.msra.mxu0 0.0
    %1572 = vmatprep.subr.mxu0 0.0
    %1573 = vmatpush1.msra.mxu0 0.0
    %1574 = vmatprep.subr.mxu0 0.0
    %1575 = vmatpush1.msra.mxu0 0.0
    %1576 = vmatprep.subr.mxu0 0.0
    %1577 = vmatpush1.msra.mxu0 0.0
    %1578 = vmatprep.subr.mxu0 0.0
    %1579 = vmatpush1.msra.mxu0 0.0
    %1580 = vmatprep.subr.mxu0 0.0
    %1581 = vmatpush1.msra.mxu0 0.0
    %1582 = vmatprep.subr.mxu0 0.0
    %1583 = vmatpush1.msra.mxu0 0.0
    %1584 = vmatprep.subr.mxu0 0.0
    %1585 = vmatpush1.msra.mxu0 0.0
    %1586 = vmatprep.subr.mxu0 0.0
    %1587 = vmatpush1.msra.mxu0 0.0
    %1588 = vmatprep.subr.mxu0 0.0
    %1589 = vmatpush1.msra.mxu0 0.0
    %1590 = vmatprep.subr.mxu0 0.0
    %1591 = vmatpush1.msra.mxu0 0.0
    %1592 = vmatprep.subr.mxu0 0.0
    %1593 = vmatpush1.msra.mxu0 0.0
    %1594 = vmatprep.subr.mxu0 0.0
    %1595 = vmatpush1.msra.mxu0 0.0
    %1596 = vmatprep.subr.mxu0 0.0
    %1597 = vmatpush1.msra.mxu0 0.0
    %1598 = vmatprep.subr.mxu0 0.0
    %1599 = vmatpush1.msra.mxu0 0.0
    %1600 = vmatprep.subr.mxu0 0.0
    %1601 = vmatpush1.msra.mxu0 0.0
    %1602 = vmatprep.subr.mxu0 0.0
    %1603 = vmatpush1.msra.mxu0 0.0
    %1604 = vmatprep.subr.mxu0 0.0
    %1605 = vmatpush1.msra.mxu0 0.0
    %1606 = vmatprep.subr.mxu0 0.0
    %1607 = vmatpush1.msra.mxu0 0.0
    %1608 = vmatprep.subr.mxu0 0.0
    %1609 = vmatpush1.msra.mxu0 0.0
    %1610 = vmatprep.subr.mxu0 0.0
    %1611 = vmatpush1.msra.mxu0 0.0
    %1612 = vmatprep.subr.mxu0 0.0
    %1613 = vmatpush1.msra.mxu0 0.0
    %1614 = vmatprep.subr.mxu0 0.0
    %1615 = vmatpush1.msra.mxu0 0.0
    %1616 = vmatprep.subr.mxu0 0.0
    %1617 = vmatpush1.msra.mxu0 0.0
    %1618 = vmatprep.mubr.f32.mxu0 0.0
    %1619 = vmatmul.mubr.f32.gmra.mrb[0].mxu0 %v1324
    %v1620 = vpop.f32.mrb[0].mxu0
    %v1621 = vadd.f32 0.0, %v1620
    %v1622 = vpop.f32.mrb[0].mxu0
    %1623 = vmatprep.mubr.f32.mxu0 0.0
    %1624 = vmatmul.mubr.f32.gmra.mrb[0].mxu0 %v1327
    %v1625 = vpop.f32.mrb[0].mxu0
    %v1626 = vadd.f32 0.0, %v1625
    %v1627 = vpop.f32.mrb[0].mxu0
    %1628 = vdwg.mxu0
    %1629 = vmatprep.subr.mxu0 0.0
    %1630 = vmatpush1.msra.mxu0 %v1315
    %1631 = vmatprep.subr.mxu0 0.0
    %1632 = vmatpush1.msra.mxu0 0.0
    %1633 = vmatprep.subr.mxu0 0.0
    %1634 = vmatpush1.msra.mxu0 0.0
    %1635 = vmatprep.subr.mxu0 0.0
    %1636 = vmatpush1.msra.mxu0 0.0
    %1637 = vmatprep.subr.mxu0 0.0
    %1638 = vmatpush1.msra.mxu0 0.0
    %1639 = vmatprep.subr.mxu0 0.0
    %1640 = vmatpush1.msra.mxu0 0.0
    %1641 = vmatprep.subr.mxu0 0.0
    %1642 = vmatpush1.msra.mxu0 0.0
    %1643 = vmatprep.subr.mxu0 0.0
    %1644 = vmatpush1.msra.mxu0 0.0
    %1645 = vmatprep.subr.mxu0 0.0
    %1646 = vmatpush1.msra.mxu0 0.0
    %1647 = vmatprep.subr.mxu0 0.0
    %1648 = vmatpush1.msra.mxu0 0.0
    %1649 = vmatprep.subr.mxu0 0.0
    %1650 = vmatpush1.msra.mxu0 0.0
    %1651 = vmatprep.subr.mxu0 0.0
    %1652 = vmatpush1.msra.mxu0 0.0
    %1653 = vmatprep.subr.mxu0 0.0
    %1654 = vmatpush1.msra.mxu0 0.0
    %1655 = vmatprep.subr.mxu0 0.0
    %1656 = vmatpush1.msra.mxu0 0.0
    %1657 = vmatprep.subr.mxu0 0.0
    %1658 = vmatpush1.msra.mxu0 0.0
    %1659 = vmatprep.subr.mxu0 0.0
    %1660 = vmatpush1.msra.mxu0 0.0
    %1661 = vmatprep.subr.mxu0 0.0
    %1662 = vmatpush1.msra.mxu0 0.0
    %1663 = vmatprep.subr.mxu0 0.0
    %1664 = vmatpush1.msra.mxu0 0.0
    %1665 = vmatprep.subr.mxu0 0.0
    %1666 = vmatpush1.msra.mxu0 0.0
    %1667 = vmatprep.subr.mxu0 0.0
    %1668 = vmatpush1.msra.mxu0 0.0
    %1669 = vmatprep.subr.mxu0 0.0
    %1670 = vmatpush1.msra.mxu0 0.0
    %1671 = vmatprep.subr.mxu0 0.0
    %1672 = vmatpush1.msra.mxu0 0.0
    %1673 = vmatprep.subr.mxu0 0.0
    %1674 = vmatpush1.msra.mxu0 0.0
    %1675 = vmatprep.subr.mxu0 0.0
    %1676 = vmatpush1.msra.mxu0 0.0
    %1677 = vmatprep.subr.mxu0 0.0
    %1678 = vmatpush1.msra.mxu0 0.0
    %1679 = vmatprep.subr.mxu0 0.0
    %1680 = vmatpush1.msra.mxu0 0.0
    %1681 = vmatprep.subr.mxu0 0.0
    %1682 = vmatpush1.msra.mxu0 0.0
    %1683 = vmatprep.subr.mxu0 0.0
    %1684 = vmatpush1.msra.mxu0 0.0
    %1685 = vmatprep.subr.mxu0 0.0
    %1686 = vmatpush1.msra.mxu0 0.0
    %1687 = vmatprep.subr.mxu0 0.0
    %1688 = vmatpush1.msra.mxu0 0.0
    %1689 = vmatprep.subr.mxu0 0.0
    %1690 = vmatpush1.msra.mxu0 0.0
    %1691 = vmatprep.subr.mxu0 0.0
    %1692 = vmatpush1.msra.mxu0 0.0
    %1693 = vmatprep.mubr.f32.mxu0 0.0
    %1694 = vmatmul.mubr.f32.gmra.mrb[0].mxu0 %v1324
    %v1695 = vpop.f32.mrb[0].mxu0
    %v1696 = vadd.f32 0.0, %v1695
    %v1697 = vpop.f32.mrb[0].mxu0
    %1698 = vmatprep.mubr.f32.mxu0 0.0
    %1699 = vmatmul.mubr.f32.gmra.mrb[0].mxu0 %v1327
    %v1700 = vpop.f32.mrb[0].mxu0
    %v1701 = vadd.f32 0.0, %v1700
    %v1702 = vpop.f32.mrb[0].mxu0
    %1703 = vdwg.mxu0
    %1704 = vmatprep.subr.mxu0 0.0
    %1705 = vmatpush1.msra.mxu0 %v1317
    %1706 = vmatprep.subr.mxu0 0.0
    %1707 = vmatpush1.msra.mxu0 0.0
    %1708 = vmatprep.subr.mxu0 0.0
    %1709 = vmatpush1.msra.mxu0 0.0
    %1710 = vmatprep.subr.mxu0 0.0
    %1711 = vmatpush1.msra.mxu0 0.0
    %1712 = vmatprep.subr.mxu0 0.0
    %1713 = vmatpush1.msra.mxu0 0.0
    %1714 = vmatprep.subr.mxu0 0.0
    %1715 = vmatpush1.msra.mxu0 0.0
    %1716 = vmatprep.subr.mxu0 0.0
    %1717 = vmatpush1.msra.mxu0 0.0
    %1718 = vmatprep.subr.mxu0 0.0
    %1719 = vmatpush1.msra.mxu0 0.0
    %1720 = vmatprep.subr.mxu0 0.0
    %1721 = vmatpush1.msra.mxu0 0.0
    %1722 = vmatprep.subr.mxu0 0.0
    %1723 = vmatpush1.msra.mxu0 0.0
    %1724 = vmatprep.subr.mxu0 0.0
    %1725 = vmatpush1.msra.mxu0 0.0
    %1726 = vmatprep.subr.mxu0 0.0
    %1727 = vmatpush1.msra.mxu0 0.0
    %1728 = vmatprep.subr.mxu0 0.0
    %1729 = vmatpush1.msra.mxu0 0.0
    %1730 = vmatprep.subr.mxu0 0.0
    %1731 = vmatpush1.msra.mxu0 0.0
    %1732 = vmatprep.subr.mxu0 0.0
    %1733 = vmatpush1.msra.mxu0 0.0
    %1734 = vmatprep.subr.mxu0 0.0
    %1735 = vmatpush1.msra.mxu0 0.0
    %1736 = vmatprep.subr.mxu0 0.0
    %1737 = vmatpush1.msra.mxu0 0.0
    %1738 = vmatprep.subr.mxu0 0.0
    %1739 = vmatpush1.msra.mxu0 0.0
    %1740 = vmatprep.subr.mxu0 0.0
    %1741 = vmatpush1.msra.mxu0 0.0
    %1742 = vmatprep.subr.mxu0 0.0
    %1743 = vmatpush1.msra.mxu0 0.0
    %1744 = vmatprep.subr.mxu0 0.0
    %1745 = vmatpush1.msra.mxu0 0.0
    %1746 = vmatprep.subr.mxu0 0.0
    %1747 = vmatpush1.msra.mxu0 0.0
    %1748 = vmatprep.subr.mxu0 0.0
    %1749 = vmatpush1.msra.mxu0 0.0
    %1750 = vmatprep.subr.mxu0 0.0
    %1751 = vmatpush1.msra.mxu0 0.0
    %1752 = vmatprep.subr.mxu0 0.0
    %1753 = vmatpush1.msra.mxu0 0.0
    %1754 = vmatprep.subr.mxu0 0.0
    %1755 = vmatpush1.msra.mxu0 0.0
    %1756 = vmatprep.subr.mxu0 0.0
    %1757 = vmatpush1.msra.mxu0 0.0
    %1758 = vmatprep.subr.mxu0 0.0
    %1759 = vmatpush1.msra.mxu0 0.0
    %1760 = vmatprep.subr.mxu0 0.0
    %1761 = vmatpush1.msra.mxu0 0.0
    %1762 = vmatprep.subr.mxu0 0.0
    %1763 = vmatpush1.msra.mxu0 0.0
    %1764 = vmatprep.subr.mxu0 0.0
    %1765 = vmatpush1.msra.mxu0 0.0
    %1766 = vmatprep.subr.mxu0 0.0
    %1767 = vmatpush1.msra.mxu0 0.0
    %1768 = vmatprep.mubr.f32.mxu0 0.0
    %1769 = vmatmul.mubr.f32.gmra.mrb[0].mxu0 %v1324
    %v1770 = vpop.f32.mrb[0].mxu0
    %v1771 = vadd.f32 0.0, %v1770
    %v1772 = vpop.f32.mrb[0].mxu0
    %1773 = vmatprep.mubr.f32.mxu0 0.0
    %1774 = vmatmul.mubr.f32.gmra.mrb[0].mxu0 %v1327
    %v1775 = vpop.f32.mrb[0].mxu0
    %v1776 = vadd.f32 0.0, %v1775
    %v1777 = vpop.f32.mrb[0].mxu0
    %1778 = vdwg.mxu0
    %1779 = vmatprep.subr.mxu0 0.0
    %1780 = vmatpush1.msra.mxu0 %v1319
    %1781 = vmatprep.subr.mxu0 0.0
    %1782 = vmatpush1.msra.mxu0 0.0
    %1783 = vmatprep.subr.mxu0 0.0
    %1784 = vmatpush1.msra.mxu0 0.0
    %1785 = vmatprep.subr.mxu0 0.0
    %1786 = vmatpush1.msra.mxu0 0.0
    %1787 = vmatprep.subr.mxu0 0.0
    %1788 = vmatpush1.msra.mxu0 0.0
    %1789 = vmatprep.subr.mxu0 0.0
    %1790 = vmatpush1.msra.mxu0 0.0
    %1791 = vmatprep.subr.mxu0 0.0
    %1792 = vmatpush1.msra.mxu0 0.0
    %1793 = vmatprep.subr.mxu0 0.0
    %1794 = vmatpush1.msra.mxu0 0.0
    %1795 = vmatprep.subr.mxu0 0.0
    %1796 = vmatpush1.msra.mxu0 0.0
    %1797 = vmatprep.subr.mxu0 0.0
    %1798 = vmatpush1.msra.mxu0 0.0
    %1799 = vmatprep.subr.mxu0 0.0
    %1800 = vmatpush1.msra.mxu0 0.0
    %1801 = vmatprep.subr.mxu0 0.0
    %1802 = vmatpush1.msra.mxu0 0.0
    %1803 = vmatprep.subr.mxu0 0.0
    %1804 = vmatpush1.msra.mxu0 0.0
    %1805 = vmatprep.subr.mxu0 0.0
    %1806 = vmatpush1.msra.mxu0 0.0
    %1807 = vmatprep.subr.mxu0 0.0
    %1808 = vmatpush1.msra.mxu0 0.0
    %1809 = vmatprep.subr.mxu0 0.0
    %1810 = vmatpush1.msra.mxu0 0.0
    %1811 = vmatprep.subr.mxu0 0.0
    %1812 = vmatpush1.msra.mxu0 0.0
    %1813 = vmatprep.subr.mxu0 0.0
    %1814 = vmatpush1.msra.mxu0 0.0
    %1815 = vmatprep.subr.mxu0 0.0
    %1816 = vmatpush1.msra.mxu0 0.0
    %1817 = vmatprep.subr.mxu0 0.0
    %1818 = vmatpush1.msra.mxu0 0.0
    %1819 = vmatprep.subr.mxu0 0.0
    %1820 = vmatpush1.msra.mxu0 0.0
    %1821 = vmatprep.subr.mxu0 0.0
    %1822 = vmatpush1.msra.mxu0 0.0
    %1823 = vmatprep.subr.mxu0 0.0
    %1824 = vmatpush1.msra.mxu0 0.0
    %1825 = vmatprep.subr.mxu0 0.0
    %1826 = vmatpush1.msra.mxu0 0.0
    %1827 = vmatprep.subr.mxu0 0.0
    %1828 = vmatpush1.msra.mxu0 0.0
    %1829 = vmatprep.subr.mxu0 0.0
    %1830 = vmatpush1.msra.mxu0 0.0
    %1831 = vmatprep.subr.mxu0 0.0
    %1832 = vmatpush1.msra.mxu0 0.0
    %1833 = vmatprep.subr.mxu0 0.0
    %1834 = vmatpush1.msra.mxu0 0.0
    %1835 = vmatprep.subr.mxu0 0.0
    %1836 = vmatpush1.msra.mxu0 0.0
    %1837 = vmatprep.subr.mxu0 0.0
    %1838 = vmatpush1.msra.mxu0 0.0
    %1839 = vmatprep.subr.mxu0 0.0
    %1840 = vmatpush1.msra.mxu0 0.0
    %1841 = vmatprep.subr.mxu0 0.0
    %1842 = vmatpush1.msra.mxu0 0.0
    %1843 = vmatprep.mubr.f32.mxu0 0.0
    %1844 = vmatmul.mubr.f32.gmra.mrb[0].mxu0 %v1324
    %v1845 = vpop.f32.mrb[0].mxu0
    %v1846 = vadd.f32 0.0, %v1845
    %v1847 = vpop.f32.mrb[0].mxu0
    %1848 = vmatprep.mubr.f32.mxu0 0.0
    %1849 = vmatmul.mubr.f32.gmra.mrb[0].mxu0 %v1327
    %v1850 = vpop.f32.mrb[0].mxu0
    %v1851 = vadd.f32 0.0, %v1850
    %v1852 = vpop.f32.mrb[0].mxu0
    %1853 = vdwg.mxu0
    %1854 = vmatprep.subr.mxu0 0.0
    %1855 = vmatpush1.msra.mxu0 %v1321
    %1856 = vmatprep.subr.mxu0 0.0
    %1857 = vmatpush1.msra.mxu0 0.0
    %1858 = vmatprep.subr.mxu0 0.0
    %1859 = vmatpush1.msra.mxu0 0.0
    %1860 = vmatprep.subr.mxu0 0.0
    %1861 = vmatpush1.msra.mxu0 0.0
    %1862 = vmatprep.subr.mxu0 0.0
    %1863 = vmatpush1.msra.mxu0 0.0
    %1864 = vmatprep.subr.mxu0 0.0
    %1865 = vmatpush1.msra.mxu0 0.0
    %1866 = vmatprep.subr.mxu0 0.0
    %1867 = vmatpush1.msra.mxu0 0.0
    %1868 = vmatprep.subr.mxu0 0.0
    %1869 = vmatpush1.msra.mxu0 0.0
    %1870 = vmatprep.subr.mxu0 0.0
    %1871 = vmatpush1.msra.mxu0 0.0
    %1872 = vmatprep.subr.mxu0 0.0
    %1873 = vmatpush1.msra.mxu0 0.0
    %1874 = vmatprep.subr.mxu0 0.0
    %1875 = vmatpush1.msra.mxu0 0.0
    %1876 = vmatprep.subr.mxu0 0.0
    %1877 = vmatpush1.msra.mxu0 0.0
    %1878 = vmatprep.subr.mxu0 0.0
    %1879 = vmatpush1.msra.mxu0 0.0
    %1880 = vmatprep.subr.mxu0 0.0
    %1881 = vmatpush1.msra.mxu0 0.0
    %1882 = vmatprep.subr.mxu0 0.0
    %1883 = vmatpush1.msra.mxu0 0.0
    %1884 = vmatprep.subr.mxu0 0.0
    %1885 = vmatpush1.msra.mxu0 0.0
    %1886 = vmatprep.subr.mxu0 0.0
    %1887 = vmatpush1.msra.mxu0 0.0
    %1888 = vmatprep.subr.mxu0 0.0
    %1889 = vmatpush1.msra.mxu0 0.0
    %1890 = vmatprep.subr.mxu0 0.0
    %1891 = vmatpush1.msra.mxu0 0.0
    %1892 = vmatprep.subr.mxu0 0.0
    %1893 = vmatpush1.msra.mxu0 0.0
    %1894 = vmatprep.subr.mxu0 0.0
    %1895 = vmatpush1.msra.mxu0 0.0
    %1896 = vmatprep.subr.mxu0 0.0
    %1897 = vmatpush1.msra.mxu0 0.0
    %1898 = vmatprep.subr.mxu0 0.0
    %1899 = vmatpush1.msra.mxu0 0.0
    %1900 = vmatprep.subr.mxu0 0.0
    %1901 = vmatpush1.msra.mxu0 0.0
    %1902 = vmatprep.subr.mxu0 0.0
    %1903 = vmatpush1.msra.mxu0 0.0
    %1904 = vmatprep.subr.mxu0 0.0
    %1905 = vmatpush1.msra.mxu0 0.0
    %1906 = vmatprep.subr.mxu0 0.0
    %1907 = vmatpush1.msra.mxu0 0.0
    %1908 = vmatprep.subr.mxu0 0.0
    %1909 = vmatpush1.msra.mxu0 0.0
    %1910 = vmatprep.subr.mxu0 0.0
    %1911 = vmatpush1.msra.mxu0 0.0
    %1912 = vmatprep.subr.mxu0 0.0
    %1913 = vmatpush1.msra.mxu0 0.0
    %1914 = vmatprep.subr.mxu0 0.0
    %1915 = vmatpush1.msra.mxu0 0.0
    %1916 = vmatprep.subr.mxu0 0.0
    %1917 = vmatpush1.msra.mxu0 0.0
    %1918 = vmatprep.mubr.f32.mxu0 0.0
    %1919 = vmatmul.mubr.f32.gmra.mrb[0].mxu0 %v1324
    %v1920 = vpop.f32.mrb[0].mxu0
    %v1921 = vadd.f32 0.0, %v1920
    %v1922 = vpop.f32.mrb[0].mxu0
    %1923 = vmatprep.mubr.f32.mxu0 0.0
    %1924 = vmatmul.mubr.f32.gmra.mrb[0].mxu0 %v1327
    %v1925 = vpop.f32.mrb[0].mxu0
    %v1926 = vadd.f32 0.0, %v1925
    %v1927 = vpop.f32.mrb[0].mxu0
    %1928 = vdwg.mxu0
    %v1930 = vsel %vm1322, %v1396, 0
    %v1933 = vsel %vm1322, %v1401, 0
    %v1936 = vsel %vm1322, %v89, 0
    %v1939 = vsel %vm1322, %v90, 0
    %1941 = vmatprep.subr.mxu0 0.0
    %1942 = vmatpush1.xpose.msra.mxu0 %v1936
    %1943 = vmatprep.subr.mxu0 0.0
    %1944 = vmatpush1.xpose.msra.mxu0 %v1939
    %1945 = vmatprep.subr.mxu0 0.0
    %1946 = vmatpush1.xpose.msra.mxu0 0.0
    %1947 = vmatprep.subr.mxu0 0.0
    %1948 = vmatpush1.xpose.msra.mxu0 0.0
    %1949 = vmatprep.subr.mxu0 0.0
    %1950 = vmatpush1.xpose.msra.mxu0 0.0
    %1951 = vmatprep.subr.mxu0 0.0
    %1952 = vmatpush1.xpose.msra.mxu0 0.0
    %1953 = vmatprep.subr.mxu0 0.0
    %1954 = vmatpush1.xpose.msra.mxu0 0.0
    %1955 = vmatprep.subr.mxu0 0.0
    %1956 = vmatpush1.xpose.msra.mxu0 0.0
    %1957 = vmatprep.subr.mxu0 0.0
    %1958 = vmatpush1.xpose.msra.mxu0 0.0
    %1959 = vmatprep.subr.mxu0 0.0
    %1960 = vmatpush1.xpose.msra.mxu0 0.0
    %1961 = vmatprep.subr.mxu0 0.0
    %1962 = vmatpush1.xpose.msra.mxu0 0.0
    %1963 = vmatprep.subr.mxu0 0.0
    %1964 = vmatpush1.xpose.msra.mxu0 0.0
    %1965 = vmatprep.subr.mxu0 0.0
    %1966 = vmatpush1.xpose.msra.mxu0 0.0
    %1967 = vmatprep.subr.mxu0 0.0
    %1968 = vmatpush1.xpose.msra.mxu0 0.0
    %1969 = vmatprep.subr.mxu0 0.0
    %1970 = vmatpush1.xpose.msra.mxu0 0.0
    %1971 = vmatprep.subr.mxu0 0.0
    %1972 = vmatpush1.xpose.msra.mxu0 0.0
    %1973 = vmatprep.subr.mxu0 0.0
    %1974 = vmatpush1.xpose.msra.mxu0 0.0
    %1975 = vmatprep.subr.mxu0 0.0
    %1976 = vmatpush1.xpose.msra.mxu0 0.0
    %1977 = vmatprep.subr.mxu0 0.0
    %1978 = vmatpush1.xpose.msra.mxu0 0.0
    %1979 = vmatprep.subr.mxu0 0.0
    %1980 = vmatpush1.xpose.msra.mxu0 0.0
    %1981 = vmatprep.subr.mxu0 0.0
    %1982 = vmatpush1.xpose.msra.mxu0 0.0
    %1983 = vmatprep.subr.mxu0 0.0
    %1984 = vmatpush1.xpose.msra.mxu0 0.0
    %1985 = vmatprep.subr.mxu0 0.0
    %1986 = vmatpush1.xpose.msra.mxu0 0.0
    %1987 = vmatprep.subr.mxu0 0.0
    %1988 = vmatpush1.xpose.msra.mxu0 0.0
    %1989 = vmatprep.subr.mxu0 0.0
    %1990 = vmatpush1.xpose.msra.mxu0 0.0
    %1991 = vmatprep.subr.mxu0 0.0
    %1992 = vmatpush1.xpose.msra.mxu0 0.0
    %1993 = vmatprep.subr.mxu0 0.0
    %1994 = vmatpush1.xpose.msra.mxu0 0.0
    %1995 = vmatprep.subr.mxu0 0.0
    %1996 = vmatpush1.xpose.msra.mxu0 0.0
    %1997 = vmatprep.subr.mxu0 0.0
    %1998 = vmatpush1.xpose.msra.mxu0 0.0
    %1999 = vmatprep.subr.mxu0 0.0
    %2000 = vmatpush1.xpose.msra.mxu0 0.0
    %2001 = vmatprep.subr.mxu0 0.0
    %2002 = vmatpush1.xpose.msra.mxu0 0.0
    %2003 = vmatprep.subr.mxu0 0.0
    %2004 = vmatpush1.xpose.msra.mxu0 0.0
    %2005 = vmatprep.mubr.f32.mxu0 0.0
    %2006 = vmatmul.mubr.f32.gmra.mrb[0].mxu0 %v1930
    %v2007 = vpop.f32.mrb[0].mxu0
    %v2008 = vadd.f32 0.0, %v2007
    %v2009 = vpop.f32.mrb[0].mxu0
    %2010 = vmatprep.mubr.f32.mxu0 0.0
    %2011 = vmatmul.mubr.f32.gmra.mrb[0].mxu0 %v1933
    %v2012 = vpop.f32.mrb[0].mxu0
    %v2013 = vadd.f32 0.0, %v2012
    %v2014 = vpop.f32.mrb[0].mxu0
    %2015 = vdwg.mxu0
    %v2017 = vsel %vm1322, %v1471, 0
    %v2020 = vsel %vm1322, %v1476, 0
    %2022 = vmatprep.subr.mxu0 0.0
    %2023 = vmatpush1.xpose.msra.mxu0 %v1936
    %2024 = vmatprep.subr.mxu0 0.0
    %2025 = vmatpush1.xpose.msra.mxu0 %v1939
    %2026 = vmatprep.subr.mxu0 0.0
    %2027 = vmatpush1.xpose.msra.mxu0 0.0
    %2028 = vmatprep.subr.mxu0 0.0
    %2029 = vmatpush1.xpose.msra.mxu0 0.0
    %2030 = vmatprep.subr.mxu0 0.0
    %2031 = vmatpush1.xpose.msra.mxu0 0.0
    %2032 = vmatprep.subr.mxu0 0.0
    %2033 = vmatpush1.xpose.msra.mxu0 0.0
    %2034 = vmatprep.subr.mxu0 0.0
    %2035 = vmatpush1.xpose.msra.mxu0 0.0
    %2036 = vmatprep.subr.mxu0 0.0
    %2037 = vmatpush1.xpose.msra.mxu0 0.0
    %2038 = vmatprep.subr.mxu0 0.0
    %2039 = vmatpush1.xpose.msra.mxu0 0.0
    %2040 = vmatprep.subr.mxu0 0.0
    %2041 = vmatpush1.xpose.msra.mxu0 0.0
    %2042 = vmatprep.subr.mxu0 0.0
    %2043 = vmatpush1.xpose.msra.mxu0 0.0
    %2044 = vmatprep.subr.mxu0 0.0
    %2045 = vmatpush1.xpose.msra.mxu0 0.0
    %2046 = vmatprep.subr.mxu0 0.0
    %2047 = vmatpush1.xpose.msra.mxu0 0.0
    %2048 = vmatprep.subr.mxu0 0.0
    %2049 = vmatpush1.xpose.msra.mxu0 0.0
    %2050 = vmatprep.subr.mxu0 0.0
    %2051 = vmatpush1.xpose.msra.mxu0 0.0
    %2052 = vmatprep.subr.mxu0 0.0
    %2053 = vmatpush1.xpose.msra.mxu0 0.0
    %2054 = vmatprep.subr.mxu0 0.0
    %2055 = vmatpush1.xpose.msra.mxu0 0.0
    %2056 = vmatprep.subr.mxu0 0.0
    %2057 = vmatpush1.xpose.msra.mxu0 0.0
    %2058 = vmatprep.subr.mxu0 0.0
    %2059 = vmatpush1.xpose.msra.mxu0 0.0
    %2060 = vmatprep.subr.mxu0 0.0
    %2061 = vmatpush1.xpose.msra.mxu0 0.0
    %2062 = vmatprep.subr.mxu0 0.0
    %2063 = vmatpush1.xpose.msra.mxu0 0.0
    %2064 = vmatprep.subr.mxu0 0.0
    %2065 = vmatpush1.xpose.msra.mxu0 0.0
    %2066 = vmatprep.subr.mxu0 0.0
    %2067 = vmatpush1.xpose.msra.mxu0 0.0
    %2068 = vmatprep.subr.mxu0 0.0
    %2069 = vmatpush1.xpose.msra.mxu0 0.0
    %2070 = vmatprep.subr.mxu0 0.0
    %2071 = vmatpush1.xpose.msra.mxu0 0.0
    %2072 = vmatprep.subr.mxu0 0.0
    %2073 = vmatpush1.xpose.msra.mxu0 0.0
    %2074 = vmatprep.subr.mxu0 0.0
    %2075 = vmatpush1.xpose.msra.mxu0 0.0
    %2076 = vmatprep.subr.mxu0 0.0
    %2077 = vmatpush1.xpose.msra.mxu0 0.0
    %2078 = vmatprep.subr.mxu0 0.0
    %2079 = vmatpush1.xpose.msra.mxu0 0.0
    %2080 = vmatprep.subr.mxu0 0.0
    %2081 = vmatpush1.xpose.msra.mxu0 0.0
    %2082 = vmatprep.subr.mxu0 0.0
    %2083 = vmatpush1.xpose.msra.mxu0 0.0
    %2084 = vmatprep.subr.mxu0 0.0
    %2085 = vmatpush1.xpose.msra.mxu0 0.0
    %2086 = vmatprep.mubr.f32.mxu0 0.0
    %2087 = vmatmul.mubr.f32.gmra.mrb[0].mxu0 %v2017
    %v2088 = vpop.f32.mrb[0].mxu0
    %v2089 = vadd.f32 0.0, %v2088
    %v2090 = vpop.f32.mrb[0].mxu0
    %2091 = vmatprep.mubr.f32.mxu0 0.0
    %2092 = vmatmul.mubr.f32.gmra.mrb[0].mxu0 %v2020
    %v2093 = vpop.f32.mrb[0].mxu0
    %v2094 = vadd.f32 0.0, %v2093
    %v2095 = vpop.f32.mrb[0].mxu0
    %2096 = vdwg.mxu0
    %v2098 = vsel %vm1322, %v1546, 0
    %v2101 = vsel %vm1322, %v1551, 0
    %2103 = vmatprep.subr.mxu0 0.0
    %2104 = vmatpush1.xpose.msra.mxu0 %v1936
    %2105 = vmatprep.subr.mxu0 0.0
    %2106 = vmatpush1.xpose.msra.mxu0 %v1939
    %2107 = vmatprep.subr.mxu0 0.0
    %2108 = vmatpush1.xpose.msra.mxu0 0.0
    %2109 = vmatprep.subr.mxu0 0.0
    %2110 = vmatpush1.xpose.msra.mxu0 0.0
    %2111 = vmatprep.subr.mxu0 0.0
    %2112 = vmatpush1.xpose.msra.mxu0 0.0
    %2113 = vmatprep.subr.mxu0 0.0
    %2114 = vmatpush1.xpose.msra.mxu0 0.0
    %2115 = vmatprep.subr.mxu0 0.0
    %2116 = vmatpush1.xpose.msra.mxu0 0.0
    %2117 = vmatprep.subr.mxu0 0.0
    %2118 = vmatpush1.xpose.msra.mxu0 0.0
    %2119 = vmatprep.subr.mxu0 0.0
    %2120 = vmatpush1.xpose.msra.mxu0 0.0
    %2121 = vmatprep.subr.mxu0 0.0
    %2122 = vmatpush1.xpose.msra.mxu0 0.0
    %2123 = vmatprep.subr.mxu0 0.0
    %2124 = vmatpush1.xpose.msra.mxu0 0.0
    %2125 = vmatprep.subr.mxu0 0.0
    %2126 = vmatpush1.xpose.msra.mxu0 0.0
    %2127 = vmatprep.subr.mxu0 0.0
    %2128 = vmatpush1.xpose.msra.mxu0 0.0
    %2129 = vmatprep.subr.mxu0 0.0
    %2130 = vmatpush1.xpose.msra.mxu0 0.0
    %2131 = vmatprep.subr.mxu0 0.0
    %2132 = vmatpush1.xpose.msra.mxu0 0.0
    %2133 = vmatprep.subr.mxu0 0.0
    %2134 = vmatpush1.xpose.msra.mxu0 0.0
    %2135 = vmatprep.subr.mxu0 0.0
    %2136 = vmatpush1.xpose.msra.mxu0 0.0
    %2137 = vmatprep.subr.mxu0 0.0
    %2138 = vmatpush1.xpose.msra.mxu0 0.0
    %2139 = vmatprep.subr.mxu0 0.0
    %2140 = vmatpush1.xpose.msra.mxu0 0.0
    %2141 = vmatprep.subr.mxu0 0.0
    %2142 = vmatpush1.xpose.msra.mxu0 0.0
    %2143 = vmatprep.subr.mxu0 0.0
    %2144 = vmatpush1.xpose.msra.mxu0 0.0
    %2145 = vmatprep.subr.mxu0 0.0
    %2146 = vmatpush1.xpose.msra.mxu0 0.0
    %2147 = vmatprep.subr.mxu0 0.0
    %2148 = vmatpush1.xpose.msra.mxu0 0.0
    %2149 = vmatprep.subr.mxu0 0.0
    %2150 = vmatpush1.xpose.msra.mxu0 0.0
    %2151 = vmatprep.subr.mxu0 0.0
    %2152 = vmatpush1.xpose.msra.mxu0 0.0
    %2153 = vmatprep.subr.mxu0 0.0
    %2154 = vmatpush1.xpose.msra.mxu0 0.0
    %2155 = vmatprep.subr.mxu0 0.0
    %2156 = vmatpush1.xpose.msra.mxu0 0.0
    %2157 = vmatprep.subr.mxu0 0.0
    %2158 = vmatpush1.xpose.msra.mxu0 0.0
    %2159 = vmatprep.subr.mxu0 0.0
    %2160 = vmatpush1.xpose.msra.mxu0 0.0
    %2161 = vmatprep.subr.mxu0 0.0
    %2162 = vmatpush1.xpose.msra.mxu0 0.0
    %2163 = vmatprep.subr.mxu0 0.0
    %2164 = vmatpush1.xpose.msra.mxu0 0.0
    %2165 = vmatprep.subr.mxu0 0.0
    %2166 = vmatpush1.xpose.msra.mxu0 0.0
    %2167 = vmatprep.mubr.f32.mxu0 0.0
    %2168 = vmatmul.mubr.f32.gmra.mrb[0].mxu0 %v2098
    %v2169 = vpop.f32.mrb[0].mxu0
    %v2170 = vadd.f32 0.0, %v2169
    %v2171 = vpop.f32.mrb[0].mxu0
    %2172 = vmatprep.mubr.f32.mxu0 0.0
    %2173 = vmatmul.mubr.f32.gmra.mrb[0].mxu0 %v2101
    %v2174 = vpop.f32.mrb[0].mxu0
    %v2175 = vadd.f32 0.0, %v2174
    %v2176 = vpop.f32.mrb[0].mxu0
    %2177 = vdwg.mxu0
    %v2179 = vsel %vm1322, %v1621, 0
    %v2182 = vsel %vm1322, %v1626, 0
    %2184 = vmatprep.subr.mxu0 0.0
    %2185 = vmatpush1.xpose.msra.mxu0 %v1936
    %2186 = vmatprep.subr.mxu0 0.0
    %2187 = vmatpush1.xpose.msra.mxu0 %v1939
    %2188 = vmatprep.subr.mxu0 0.0
    %2189 = vmatpush1.xpose.msra.mxu0 0.0
    %2190 = vmatprep.subr.mxu0 0.0
    %2191 = vmatpush1.xpose.msra.mxu0 0.0
    %2192 = vmatprep.subr.mxu0 0.0
    %2193 = vmatpush1.xpose.msra.mxu0 0.0
    %2194 = vmatprep.subr.mxu0 0.0
    %2195 = vmatpush1.xpose.msra.mxu0 0.0
    %2196 = vmatprep.subr.mxu0 0.0
    %2197 = vmatpush1.xpose.msra.mxu0 0.0
    %2198 = vmatprep.subr.mxu0 0.0
    %2199 = vmatpush1.xpose.msra.mxu0 0.0
    %2200 = vmatprep.subr.mxu0 0.0
    %2201 = vmatpush1.xpose.msra.mxu0 0.0
    %2202 = vmatprep.subr.mxu0 0.0
    %2203 = vmatpush1.xpose.msra.mxu0 0.0
    %2204 = vmatprep.subr.mxu0 0.0
    %2205 = vmatpush1.xpose.msra.mxu0 0.0
    %2206 = vmatprep.subr.mxu0 0.0
    %2207 = vmatpush1.xpose.msra.mxu0 0.0
    %2208 = vmatprep.subr.mxu0 0.0
    %2209 = vmatpush1.xpose.msra.mxu0 0.0
    %2210 = vmatprep.subr.mxu0 0.0
    %2211 = vmatpush1.xpose.msra.mxu0 0.0
    %2212 = vmatprep.subr.mxu0 0.0
    %2213 = vmatpush1.xpose.msra.mxu0 0.0
    %2214 = vmatprep.subr.mxu0 0.0
    %2215 = vmatpush1.xpose.msra.mxu0 0.0
    %2216 = vmatprep.subr.mxu0 0.0
    %2217 = vmatpush1.xpose.msra.mxu0 0.0
    %2218 = vmatprep.subr.mxu0 0.0
    %2219 = vmatpush1.xpose.msra.mxu0 0.0
    %2220 = vmatprep.subr.mxu0 0.0
    %2221 = vmatpush1.xpose.msra.mxu0 0.0
    %2222 = vmatprep.subr.mxu0 0.0
    %2223 = vmatpush1.xpose.msra.mxu0 0.0
    %2224 = vmatprep.subr.mxu0 0.0
    %2225 = vmatpush1.xpose.msra.mxu0 0.0
    %2226 = vmatprep.subr.mxu0 0.0
    %2227 = vmatpush1.xpose.msra.mxu0 0.0
    %2228 = vmatprep.subr.mxu0 0.0
    %2229 = vmatpush1.xpose.msra.mxu0 0.0
    %2230 = vmatprep.subr.mxu0 0.0
    %2231 = vmatpush1.xpose.msra.mxu0 0.0
    %2232 = vmatprep.subr.mxu0 0.0
    %2233 = vmatpush1.xpose.msra.mxu0 0.0
    %2234 = vmatprep.subr.mxu0 0.0
    %2235 = vmatpush1.xpose.msra.mxu0 0.0
    %2236 = vmatprep.subr.mxu0 0.0
    %2237 = vmatpush1.xpose.msra.mxu0 0.0
    %2238 = vmatprep.subr.mxu0 0.0
    %2239 = vmatpush1.xpose.msra.mxu0 0.0
    %2240 = vmatprep.subr.mxu0 0.0
    %2241 = vmatpush1.xpose.msra.mxu0 0.0
    %2242 = vmatprep.subr.mxu0 0.0
    %2243 = vmatpush1.xpose.msra.mxu0 0.0
    %2244 = vmatprep.subr.mxu0 0.0
    %2245 = vmatpush1.xpose.msra.mxu0 0.0
    %2246 = vmatprep.subr.mxu0 0.0
    %2247 = vmatpush1.xpose.msra.mxu0 0.0
    %2248 = vmatprep.mubr.f32.mxu0 0.0
    %2249 = vmatmul.mubr.f32.gmra.mrb[0].mxu0 %v2179
    %v2250 = vpop.f32.mrb[0].mxu0
    %v2251 = vadd.f32 0.0, %v2250
    %v2252 = vpop.f32.mrb[0].mxu0
    %2253 = vmatprep.mubr.f32.mxu0 0.0
    %2254 = vmatmul.mubr.f32.gmra.mrb[0].mxu0 %v2182
    %v2255 = vpop.f32.mrb[0].mxu0
    %v2256 = vadd.f32 0.0, %v2255
    %v2257 = vpop.f32.mrb[0].mxu0
    %2258 = vdwg.mxu0
    %v2260 = vsel %vm1322, %v1696, 0
    %v2263 = vsel %vm1322, %v1701, 0
    %2265 = vmatprep.subr.mxu0 0.0
    %2266 = vmatpush1.xpose.msra.mxu0 %v1936
    %2267 = vmatprep.subr.mxu0 0.0
    %2268 = vmatpush1.xpose.msra.mxu0 %v1939
    %2269 = vmatprep.subr.mxu0 0.0
    %2270 = vmatpush1.xpose.msra.mxu0 0.0
    %2271 = vmatprep.subr.mxu0 0.0
    %2272 = vmatpush1.xpose.msra.mxu0 0.0
    %2273 = vmatprep.subr.mxu0 0.0
    %2274 = vmatpush1.xpose.msra.mxu0 0.0
    %2275 = vmatprep.subr.mxu0 0.0
    %2276 = vmatpush1.xpose.msra.mxu0 0.0
    %2277 = vmatprep.subr.mxu0 0.0
    %2278 = vmatpush1.xpose.msra.mxu0 0.0
    %2279 = vmatprep.subr.mxu0 0.0
    %2280 = vmatpush1.xpose.msra.mxu0 0.0
    %2281 = vmatprep.subr.mxu0 0.0
    %2282 = vmatpush1.xpose.msra.mxu0 0.0
    %2283 = vmatprep.subr.mxu0 0.0
    %2284 = vmatpush1.xpose.msra.mxu0 0.0
    %2285 = vmatprep.subr.mxu0 0.0
    %2286 = vmatpush1.xpose.msra.mxu0 0.0
    %2287 = vmatprep.subr.mxu0 0.0
    %2288 = vmatpush1.xpose.msra.mxu0 0.0
    %2289 = vmatprep.subr.mxu0 0.0
    %2290 = vmatpush1.xpose.msra.mxu0 0.0
    %2291 = vmatprep.subr.mxu0 0.0
    %2292 = vmatpush1.xpose.msra.mxu0 0.0
    %2293 = vmatprep.subr.mxu0 0.0
    %2294 = vmatpush1.xpose.msra.mxu0 0.0
    %2295 = vmatprep.subr.mxu0 0.0
    %2296 = vmatpush1.xpose.msra.mxu0 0.0
    %2297 = vmatprep.subr.mxu0 0.0
    %2298 = vmatpush1.xpose.msra.mxu0 0.0
    %2299 = vmatprep.subr.mxu0 0.0
    %2300 = vmatpush1.xpose.msra.mxu0 0.0
    %2301 = vmatprep.subr.mxu0 0.0
    %2302 = vmatpush1.xpose.msra.mxu0 0.0
    %2303 = vmatprep.subr.mxu0 0.0
    %2304 = vmatpush1.xpose.msra.mxu0 0.0
    %2305 = vmatprep.subr.mxu0 0.0
    %2306 = vmatpush1.xpose.msra.mxu0 0.0
    %2307 = vmatprep.subr.mxu0 0.0
    %2308 = vmatpush1.xpose.msra.mxu0 0.0
    %2309 = vmatprep.subr.mxu0 0.0
    %2310 = vmatpush1.xpose.msra.mxu0 0.0
    %2311 = vmatprep.subr.mxu0 0.0
    %2312 = vmatpush1.xpose.msra.mxu0 0.0
    %2313 = vmatprep.subr.mxu0 0.0
    %2314 = vmatpush1.xpose.msra.mxu0 0.0
    %2315 = vmatprep.subr.mxu0 0.0
    %2316 = vmatpush1.xpose.msra.mxu0 0.0
    %2317 = vmatprep.subr.mxu0 0.0
    %2318 = vmatpush1.xpose.msra.mxu0 0.0
    %2319 = vmatprep.subr.mxu0 0.0
    %2320 = vmatpush1.xpose.msra.mxu0 0.0
    %2321 = vmatprep.subr.mxu0 0.0
    %2322 = vmatpush1.xpose.msra.mxu0 0.0
    %2323 = vmatprep.subr.mxu0 0.0
    %2324 = vmatpush1.xpose.msra.mxu0 0.0
    %2325 = vmatprep.subr.mxu0 0.0
    %2326 = vmatpush1.xpose.msra.mxu0 0.0
    %2327 = vmatprep.subr.mxu0 0.0
    %2328 = vmatpush1.xpose.msra.mxu0 0.0
    %2329 = vmatprep.mubr.f32.mxu0 0.0
    %2330 = vmatmul.mubr.f32.gmra.mrb[0].mxu0 %v2260
    %v2331 = vpop.f32.mrb[0].mxu0
    %v2332 = vadd.f32 0.0, %v2331
    %v2333 = vpop.f32.mrb[0].mxu0
    %2334 = vmatprep.mubr.f32.mxu0 0.0
    %2335 = vmatmul.mubr.f32.gmra.mrb[0].mxu0 %v2263
    %v2336 = vpop.f32.mrb[0].mxu0
    %v2337 = vadd.f32 0.0, %v2336
    %v2338 = vpop.f32.mrb[0].mxu0
    %2339 = vdwg.mxu0
    %v2341 = vsel %vm1322, %v1771, 0
    %v2344 = vsel %vm1322, %v1776, 0
    %2346 = vmatprep.subr.mxu0 0.0
    %2347 = vmatpush1.xpose.msra.mxu0 %v1936
    %2348 = vmatprep.subr.mxu0 0.0
    %2349 = vmatpush1.xpose.msra.mxu0 %v1939
    %2350 = vmatprep.subr.mxu0 0.0
    %2351 = vmatpush1.xpose.msra.mxu0 0.0
    %2352 = vmatprep.subr.mxu0 0.0
    %2353 = vmatpush1.xpose.msra.mxu0 0.0
    %2354 = vmatprep.subr.mxu0 0.0
    %2355 = vmatpush1.xpose.msra.mxu0 0.0
    %2356 = vmatprep.subr.mxu0 0.0
    %2357 = vmatpush1.xpose.msra.mxu0 0.0
    %2358 = vmatprep.subr.mxu0 0.0
    %2359 = vmatpush1.xpose.msra.mxu0 0.0
    %2360 = vmatprep.subr.mxu0 0.0
    %2361 = vmatpush1.xpose.msra.mxu0 0.0
    %2362 = vmatprep.subr.mxu0 0.0
    %2363 = vmatpush1.xpose.msra.mxu0 0.0
    %2364 = vmatprep.subr.mxu0 0.0
    %2365 = vmatpush1.xpose.msra.mxu0 0.0
    %2366 = vmatprep.subr.mxu0 0.0
    %2367 = vmatpush1.xpose.msra.mxu0 0.0
    %2368 = vmatprep.subr.mxu0 0.0
    %2369 = vmatpush1.xpose.msra.mxu0 0.0
    %2370 = vmatprep.subr.mxu0 0.0
    %2371 = vmatpush1.xpose.msra.mxu0 0.0
    %2372 = vmatprep.subr.mxu0 0.0
    %2373 = vmatpush1.xpose.msra.mxu0 0.0
    %2374 = vmatprep.subr.mxu0 0.0
    %2375 = vmatpush1.xpose.msra.mxu0 0.0
    %2376 = vmatprep.subr.mxu0 0.0
    %2377 = vmatpush1.xpose.msra.mxu0 0.0
    %2378 = vmatprep.subr.mxu0 0.0
    %2379 = vmatpush1.xpose.msra.mxu0 0.0
    %2380 = vmatprep.subr.mxu0 0.0
    %2381 = vmatpush1.xpose.msra.mxu0 0.0
    %2382 = vmatprep.subr.mxu0 0.0
    %2383 = vmatpush1.xpose.msra.mxu0 0.0
    %2384 = vmatprep.subr.mxu0 0.0
    %2385 = vmatpush1.xpose.msra.mxu0 0.0
    %2386 = vmatprep.subr.mxu0 0.0
    %2387 = vmatpush1.xpose.msra.mxu0 0.0
    %2388 = vmatprep.subr.mxu0 0.0
    %2389 = vmatpush1.xpose.msra.mxu0 0.0
    %2390 = vmatprep.subr.mxu0 0.0
    %2391 = vmatpush1.xpose.msra.mxu0 0.0
    %2392 = vmatprep.subr.mxu0 0.0
    %2393 = vmatpush1.xpose.msra.mxu0 0.0
    %2394 = vmatprep.subr.mxu0 0.0
    %2395 = vmatpush1.xpose.msra.mxu0 0.0
    %2396 = vmatprep.subr.mxu0 0.0
    %2397 = vmatpush1.xpose.msra.mxu0 0.0
    %2398 = vmatprep.subr.mxu0 0.0
    %2399 = vmatpush1.xpose.msra.mxu0 0.0
    %2400 = vmatprep.subr.mxu0 0.0
    %2401 = vmatpush1.xpose.msra.mxu0 0.0
    %2402 = vmatprep.subr.mxu0 0.0
    %2403 = vmatpush1.xpose.msra.mxu0 0.0
    %2404 = vmatprep.subr.mxu0 0.0
    %2405 = vmatpush1.xpose.msra.mxu0 0.0
    %2406 = vmatprep.subr.mxu0 0.0
    %2407 = vmatpush1.xpose.msra.mxu0 0.0
    %2408 = vmatprep.subr.mxu0 0.0
    %2409 = vmatpush1.xpose.msra.mxu0 0.0
    %2410 = vmatprep.mubr.f32.mxu0 0.0
    %2411 = vmatmul.mubr.f32.gmra.mrb[0].mxu0 %v2341
    %v2412 = vpop.f32.mrb[0].mxu0
    %v2413 = vadd.f32 0.0, %v2412
    %v2414 = vpop.f32.mrb[0].mxu0
    %2415 = vmatprep.mubr.f32.mxu0 0.0
    %2416 = vmatmul.mubr.f32.gmra.mrb[0].mxu0 %v2344
    %v2417 = vpop.f32.mrb[0].mxu0
    %v2418 = vadd.f32 0.0, %v2417
    %v2419 = vpop.f32.mrb[0].mxu0
    %2420 = vdwg.mxu0
    %v2422 = vsel %vm1322, %v1846, 0
    %v2425 = vsel %vm1322, %v1851, 0
    %2427 = vmatprep.subr.mxu0 0.0
    %2428 = vmatpush1.xpose.msra.mxu0 %v1936
    %2429 = vmatprep.subr.mxu0 0.0
    %2430 = vmatpush1.xpose.msra.mxu0 %v1939
    %2431 = vmatprep.subr.mxu0 0.0
    %2432 = vmatpush1.xpose.msra.mxu0 0.0
    %2433 = vmatprep.subr.mxu0 0.0
    %2434 = vmatpush1.xpose.msra.mxu0 0.0
    %2435 = vmatprep.subr.mxu0 0.0
    %2436 = vmatpush1.xpose.msra.mxu0 0.0
    %2437 = vmatprep.subr.mxu0 0.0
    %2438 = vmatpush1.xpose.msra.mxu0 0.0
    %2439 = vmatprep.subr.mxu0 0.0
    %2440 = vmatpush1.xpose.msra.mxu0 0.0
    %2441 = vmatprep.subr.mxu0 0.0
    %2442 = vmatpush1.xpose.msra.mxu0 0.0
    %2443 = vmatprep.subr.mxu0 0.0
    %2444 = vmatpush1.xpose.msra.mxu0 0.0
    %2445 = vmatprep.subr.mxu0 0.0
    %2446 = vmatpush1.xpose.msra.mxu0 0.0
    %2447 = vmatprep.subr.mxu0 0.0
    %2448 = vmatpush1.xpose.msra.mxu0 0.0
    %2449 = vmatprep.subr.mxu0 0.0
    %2450 = vmatpush1.xpose.msra.mxu0 0.0
    %2451 = vmatprep.subr.mxu0 0.0
    %2452 = vmatpush1.xpose.msra.mxu0 0.0
    %2453 = vmatprep.subr.mxu0 0.0
    %2454 = vmatpush1.xpose.msra.mxu0 0.0
    %2455 = vmatprep.subr.mxu0 0.0
    %2456 = vmatpush1.xpose.msra.mxu0 0.0
    %2457 = vmatprep.subr.mxu0 0.0
    %2458 = vmatpush1.xpose.msra.mxu0 0.0
    %2459 = vmatprep.subr.mxu0 0.0
    %2460 = vmatpush1.xpose.msra.mxu0 0.0
    %2461 = vmatprep.subr.mxu0 0.0
    %2462 = vmatpush1.xpose.msra.mxu0 0.0
    %2463 = vmatprep.subr.mxu0 0.0
    %2464 = vmatpush1.xpose.msra.mxu0 0.0
    %2465 = vmatprep.subr.mxu0 0.0
    %2466 = vmatpush1.xpose.msra.mxu0 0.0
    %2467 = vmatprep.subr.mxu0 0.0
    %2468 = vmatpush1.xpose.msra.mxu0 0.0
    %2469 = vmatprep.subr.mxu0 0.0
    %2470 = vmatpush1.xpose.msra.mxu0 0.0
    %2471 = vmatprep.subr.mxu0 0.0
    %2472 = vmatpush1.xpose.msra.mxu0 0.0
    %2473 = vmatprep.subr.mxu0 0.0
    %2474 = vmatpush1.xpose.msra.mxu0 0.0
    %2475 = vmatprep.subr.mxu0 0.0
    %2476 = vmatpush1.xpose.msra.mxu0 0.0
    %2477 = vmatprep.subr.mxu0 0.0
    %2478 = vmatpush1.xpose.msra.mxu0 0.0
    %2479 = vmatprep.subr.mxu0 0.0
    %2480 = vmatpush1.xpose.msra.mxu0 0.0
    %2481 = vmatprep.subr.mxu0 0.0
    %2482 = vmatpush1.xpose.msra.mxu0 0.0
    %2483 = vmatprep.subr.mxu0 0.0
    %2484 = vmatpush1.xpose.msra.mxu0 0.0
    %2485 = vmatprep.subr.mxu0 0.0
    %2486 = vmatpush1.xpose.msra.mxu0 0.0
    %2487 = vmatprep.subr.mxu0 0.0
    %2488 = vmatpush1.xpose.msra.mxu0 0.0
    %2489 = vmatprep.subr.mxu0 0.0
    %2490 = vmatpush1.xpose.msra.mxu0 0.0
    %2491 = vmatprep.mubr.f32.mxu0 0.0
    %2492 = vmatmul.mubr.f32.gmra.mrb[0].mxu0 %v2422
    %v2493 = vpop.f32.mrb[0].mxu0
    %v2494 = vadd.f32 0.0, %v2493
    %v2495 = vpop.f32.mrb[0].mxu0
    %2496 = vmatprep.mubr.f32.mxu0 0.0
    %2497 = vmatmul.mubr.f32.gmra.mrb[0].mxu0 %v2425
    %v2498 = vpop.f32.mrb[0].mxu0
    %v2499 = vadd.f32 0.0, %v2498
    %v2500 = vpop.f32.mrb[0].mxu0
    %2501 = vdwg.mxu0
    %v2503 = vsel %vm1322, %v1921, 0
    %v2506 = vsel %vm1322, %v1926, 0
    %2508 = vmatprep.subr.mxu0 0.0
    %2509 = vmatpush1.xpose.msra.mxu0 %v1936
    %2510 = vmatprep.subr.mxu0 0.0
    %2511 = vmatpush1.xpose.msra.mxu0 %v1939
    %2512 = vmatprep.subr.mxu0 0.0
    %2513 = vmatpush1.xpose.msra.mxu0 0.0
    %2514 = vmatprep.subr.mxu0 0.0
    %2515 = vmatpush1.xpose.msra.mxu0 0.0
    %2516 = vmatprep.subr.mxu0 0.0
    %2517 = vmatpush1.xpose.msra.mxu0 0.0
    %2518 = vmatprep.subr.mxu0 0.0
    %2519 = vmatpush1.xpose.msra.mxu0 0.0
    %2520 = vmatprep.subr.mxu0 0.0
    %2521 = vmatpush1.xpose.msra.mxu0 0.0
    %2522 = vmatprep.subr.mxu0 0.0
    %2523 = vmatpush1.xpose.msra.mxu0 0.0
    %2524 = vmatprep.subr.mxu0 0.0
    %2525 = vmatpush1.xpose.msra.mxu0 0.0
    %2526 = vmatprep.subr.mxu0 0.0
    %2527 = vmatpush1.xpose.msra.mxu0 0.0
    %2528 = vmatprep.subr.mxu0 0.0
    %2529 = vmatpush1.xpose.msra.mxu0 0.0
    %2530 = vmatprep.subr.mxu0 0.0
    %2531 = vmatpush1.xpose.msra.mxu0 0.0
    %2532 = vmatprep.subr.mxu0 0.0
    %2533 = vmatpush1.xpose.msra.mxu0 0.0
    %2534 = vmatprep.subr.mxu0 0.0
    %2535 = vmatpush1.xpose.msra.mxu0 0.0
    %2536 = vmatprep.subr.mxu0 0.0
    %2537 = vmatpush1.xpose.msra.mxu0 0.0
    %2538 = vmatprep.subr.mxu0 0.0
    %2539 = vmatpush1.xpose.msra.mxu0 0.0
    %2540 = vmatprep.subr.mxu0 0.0
    %2541 = vmatpush1.xpose.msra.mxu0 0.0
    %2542 = vmatprep.subr.mxu0 0.0
    %2543 = vmatpush1.xpose.msra.mxu0 0.0
    %2544 = vmatprep.subr.mxu0 0.0
    %2545 = vmatpush1.xpose.msra.mxu0 0.0
    %2546 = vmatprep.subr.mxu0 0.0
    %2547 = vmatpush1.xpose.msra.mxu0 0.0
    %2548 = vmatprep.subr.mxu0 0.0
    %2549 = vmatpush1.xpose.msra.mxu0 0.0
    %2550 = vmatprep.subr.mxu0 0.0
    %2551 = vmatpush1.xpose.msra.mxu0 0.0
    %2552 = vmatprep.subr.mxu0 0.0
    %2553 = vmatpush1.xpose.msra.mxu0 0.0
    %2554 = vmatprep.subr.mxu0 0.0
    %2555 = vmatpush1.xpose.msra.mxu0 0.0
    %2556 = vmatprep.subr.mxu0 0.0
    %2557 = vmatpush1.xpose.msra.mxu0 0.0
    %2558 = vmatprep.subr.mxu0 0.0
    %2559 = vmatpush1.xpose.msra.mxu0 0.0
    %2560 = vmatprep.subr.mxu0 0.0
    %2561 = vmatpush1.xpose.msra.mxu0 0.0
    %2562 = vmatprep.subr.mxu0 0.0
    %2563 = vmatpush1.xpose.msra.mxu0 0.0
    %2564 = vmatprep.subr.mxu0 0.0
    %2565 = vmatpush1.xpose.msra.mxu0 0.0
    %2566 = vmatprep.subr.mxu0 0.0
    %2567 = vmatpush1.xpose.msra.mxu0 0.0
    %2568 = vmatprep.subr.mxu0 0.0
    %2569 = vmatpush1.xpose.msra.mxu0 0.0
    %2570 = vmatprep.subr.mxu0 0.0
    %2571 = vmatpush1.xpose.msra.mxu0 0.0
    %2572 = vmatprep.mubr.f32.mxu0 0.0
    %2573 = vmatmul.mubr.f32.gmra.mrb[0].mxu0 %v2503
    %v2574 = vpop.f32.mrb[0].mxu0
    %v2575 = vadd.f32 0.0, %v2574
    %v2576 = vpop.f32.mrb[0].mxu0
    %2577 = vmatprep.mubr.f32.mxu0 0.0
    %2578 = vmatmul.mubr.f32.gmra.mrb[0].mxu0 %v2506
    %v2579 = vpop.f32.mrb[0].mxu0
    %v2580 = vadd.f32 0.0, %v2579
    %v2581 = vpop.f32.mrb[0].mxu0
    %2582 = vdwg.mxu0
    %v2583 = vmul.f32 %v61, %v2008
    %v2584 = vmul.f32 %v62, %v2013
    %v2585 = vmul.f32 %v63, %v2089
    %v2586 = vmul.f32 %v64, %v2094
    %v2587 = vmul.f32 %v65, %v2170
    %v2588 = vmul.f32 %v66, %v2175
    %v2589 = vmul.f32 %v67, %v2251
    %v2590 = vmul.f32 %v68, %v2256
    %v2591 = vmul.f32 %v69, %v2332
    %v2592 = vmul.f32 %v70, %v2337
    %v2593 = vmul.f32 %v71, %v2413
    %v2594 = vmul.f32 %v72, %v2418
    %v2595 = vmul.f32 %v73, %v2494
    %v2596 = vmul.f32 %v74, %v2499
    %v2597 = vmul.f32 %v75, %v2575
    %v2598 = vmul.f32 %v76, %v2580
    %2599 = vst.msk [vmem:[#allocation8] sm:$0xff] %vm91, %v2583
    %2600 = vst.msk [vmem:[#allocation8 + $0x8] sm:$0xff] %vm91, %v2584
    %2601 = vst.msk [vmem:[#allocation8 + $0x10] sm:$0xff] %vm91, %v2585
    %2602 = vst.msk [vmem:[#allocation8 + $0x18] sm:$0xff] %vm91, %v2586
    %2603 = vst.msk [vmem:[#allocation8 + $0x20] sm:$0xff] %vm91, %v2587
    %2604 = vst.msk [vmem:[#allocation8 + $0x28] sm:$0xff] %vm91, %v2588
    %2605 = vst.msk [vmem:[#allocation8 + $0x30] sm:$0xff] %vm91, %v2589
    %2606 = vst.msk [vmem:[#allocation8 + $0x38] sm:$0xff] %vm91, %v2590
    %2607 = vst.msk [vmem:[#allocation8 + $0x40] sm:$0xff] %vm91, %v2591
    %2608 = vst.msk [vmem:[#allocation8 + $0x48] sm:$0xff] %vm91, %v2592
    %2609 = vst.msk [vmem:[#allocation8 + $0x50] sm:$0xff] %vm91, %v2593
    %2610 = vst.msk [vmem:[#allocation8 + $0x58] sm:$0xff] %vm91, %v2594
    %2611 = vst.msk [vmem:[#allocation8 + $0x60] sm:$0xff] %vm91, %v2595
    %2612 = vst.msk [vmem:[#allocation8 + $0x68] sm:$0xff] %vm91, %v2596
    %2613 = vst.msk [vmem:[#allocation8 + $0x70] sm:$0xff] %vm91, %v2597
    %2614 = vst.msk [vmem:[#allocation8 + $0x78] sm:$0xff] %vm91, %v2598
    // Predicated region
    $region38: #{tpu_custom_call.1} parent=1 // pred_check
      _
    $region39: #{tpu_custom_call.1} parent=1 // pred_check_branch
      %2616 = sbr.rel (0) target = $region41
    $region40: #{tpu_custom_call.1} parent=1 // pred_region
      %s2618 = ssub.s32 2048, 2048
      %2619 = vsyncadd [#allocation4], %s2618
      %s2620 = sshll.u32 [#allocation8], 4
      %s2621 = int_to_ptr.vmem [resolvable:$true] %s2620
      %2626 = dma.vmem_to_hbm [thread:$0]  %s2621, 2048, %s6, [#allocation4], 128, 128, 8
    $region41: #{tpu_custom_call.1} parent=1 // pred_fallthru
      _
    // Predicated region
    $region42: #{tpu_custom_call.1} parent=1 // pred_check
      _
    $region43: #{tpu_custom_call.1} parent=1 // pred_check_branch
      %2628 = sbr.rel (0) target = $region45
    $region44: #{tpu_custom_call.1} parent=1 // pred_region
      %2629 = dma.done [#allocation4], 2048
    $region45: #{tpu_custom_call.1} parent=1 // pred_fallthru
      _
    %2630 = vsyncpa [#allocation3], 1
    %2631 = vsyncpa [#allocation6], 1
    %2632 = vsyncpa [#allocation4], 1

</llo_original>
